<compile_context>
chip_gen: v7x
topology: tpu7x:2x2x1
jax: 0.10.0
libtpu: 0.0.40
codegen_flags: <defaults>
</compile_context>

<pallas_src>
import functools

import jax
import jax.numpy as jnp
from jax.experimental import pallas as pl
from jax.experimental.pallas import tpu as pltpu

LANE = 128  # TPU lane width: keep feature dims multiples of this.


def _round_up(v, m):
    return (v + m - 1) // m * m


def _pad2d(a, rows, cols):
    pr, pc = rows - a.shape[0], cols - a.shape[1]
    if pr or pc:
        a = jnp.pad(a, ((0, pr), (0, pc)))
    return a


def _pick_tile_n(n, desired=512, min_grid=2):
    """Largest multiple of 128 <= `desired` that still yields >= `min_grid`
    grid steps, so the "parallel" batch axis can shard across v7x's two
    TensorCores and the pipeline has something to overlap."""
    n_unit = _round_up(max(n, 1), LANE)
    t = min(desired, n_unit)
    t -= t % LANE
    t = max(t, LANE)
    while t > LANE and pl.cdiv(n_unit, t) < min_grid:
        t -= LANE
    return t


def prepare_params(params):
    """One-time prep (call OUTSIDE the jitted forward).

    params: list of 8 (W, b) pairs, W is (in, out) f32, b is (1, out) f32.
    Returns (padded_list, code_dim): weights lane-padded + cast to bf16 (MXU
    operands), biases lane-padded, kept f32.
    """
    prepared = []
    for w, b in params:
        pin = _round_up(w.shape[0], LANE)
        pout = _round_up(w.shape[1], LANE)
        w = jnp.asarray(w, jnp.float32)
        b = jnp.asarray(b, jnp.float32).reshape(1, -1)
        prepared.append(_pad2d(w, pin, pout).astype(jnp.bfloat16))
        prepared.append(_pad2d(b, 1, pout))
    code_dim = params[3][0].shape[1]
    return prepared, code_dim


def autoencoder_kernel(x_ref, *refs):
    """Full autoencoder forward on one (tile_n, in_pad) bf16 batch tile.

    refs = (w0, b0, ..., w7, b7, enc_ref, dec_ref).  Weights are bf16
    (in, out); biases are f32 (1, out); all feature dims lane-padded.
    """
    param_refs = refs[:16]
    enc_ref, dec_ref = refs[16], refs[17]
    f32 = jnp.float32
    bf16 = jnp.bfloat16

    def linear(h, w_ref, b_ref):
        # bf16 operands feed the MXU; accumulate + bias stay in f32.
        return jnp.dot(h.astype(w_ref.dtype), w_ref[...],
                       preferred_element_type=f32) + b_ref[...]

    h = x_ref[...]  # bf16 straight off HBM -> first matmul operand

    # ---- encoder: (Linear + ReLU) x3, then Linear (no activation) ----
    for li in range(3):
        h = jnp.maximum(
            linear(h, param_refs[2 * li], param_refs[2 * li + 1]), 0.0
        ).astype(bf16)
    encoded = linear(h, param_refs[6], param_refs[7])        # f32
    enc_ref[...] = encoded.astype(enc_ref.dtype)

    # ---- decoder: (Linear + ReLU) x3, then Linear + Sigmoid ----
    d = encoded.astype(bf16)
    for li in range(4, 7):
        d = jnp.maximum(
            linear(d, param_refs[2 * li], param_refs[2 * li + 1]), 0.0
        ).astype(bf16)
    d = linear(d, param_refs[14], param_refs[15])             # f32
    dec_ref[...] = jax.nn.sigmoid(d).astype(dec_ref.dtype)


def _resident_param_spec(shape):
    """Block-invariant param tile: resident in VMEM, single buffer."""
    idx = lambda i: (0, 0)
    try:
        return pl.BlockSpec(shape, idx, pipeline_mode=pl.Buffered(1))
    except TypeError:  # older jax without pipeline_mode kwarg
        return pl.BlockSpec(shape, idx)


@functools.partial(jax.jit, static_argnames=("code_dim", "tile_n"))
def _autoencoder_forward_impl(x, padded, *, code_dim, tile_n):
    N, input_dim = x.shape
    in_pad = padded[0].shape[0]      # padded input_dim
    code_pad = padded[6].shape[1]    # padded code dim
    out_pad = padded[14].shape[1]    # padded output dim (== in_pad here)

    # --- stream x in bf16; pad only the axes that actually need it ---
    n_pad = _round_up(max(N, 1), tile_n)
    x_bf = x.astype(jnp.bfloat16)
    pn, pf = n_pad - N, in_pad - input_dim
    if pn or pf:
        x_bf = jnp.pad(x_bf, ((0, pn), (0, pf)))

    grid = (n_pad // tile_n,)
    x_spec = pl.BlockSpec((tile_n, in_pad), lambda i: (i, 0))
    param_specs = [_resident_param_spec(p.shape) for p in padded]
    enc_spec = pl.BlockSpec((tile_n, code_pad), lambda i: (i, 0))
    dec_spec = pl.BlockSpec((tile_n, out_pad), lambda i: (i, 0))

    # --- scheduler hints ---
    layer_dims = [(p.shape[0], p.shape[1]) for p in padded[0::2]]
    flops = 2 * n_pad * sum(di * do for di, do in layer_dims)
    param_bytes = sum(p.size * p.dtype.itemsize for p in padded)
    bytes_accessed = (x_bf.size * 2 + param_bytes
                      + n_pad * (code_pad + out_pad) * 4)
    cost = pl.CostEstimate(flops=flops,
                           transcendentals=n_pad * out_pad,  # sigmoid
                           bytes_accessed=bytes_accessed)

    # --- VMEM budget: params single-buffered (Buffered(1)); x/enc/dec tiles
    # double-buffered; headroom for the widest intermediate activation.
    # Clamp against the physical VMEM of the running chip (64 MiB on v7x).
    max_width = max(do for _, do in layer_dims)
    vmem_need = (param_bytes
                 + 2 * tile_n * in_pad * 2                   # x tiles (bf16)
                 + 2 * tile_n * (code_pad + out_pad) * 4     # output tiles
                 + 4 * tile_n * max_width * 4)               # intermediates
    try:
        phys = int(getattr(pltpu.get_tpu_info(), "vmem_capacity_bytes",
                           64 << 20))
    except Exception:
        phys = 64 << 20  # conservative: v7x per-TC VMEM
    vmem_limit = int(min(max(2 * vmem_need, 32 << 20), phys - (4 << 20)))

    enc_p, dec_p = pl.pallas_call(
        autoencoder_kernel,
        out_shape=(
            jax.ShapeDtypeStruct((n_pad, code_pad), jnp.float32),
            jax.ShapeDtypeStruct((n_pad, out_pad), jnp.float32),
        ),
        grid=grid,
        in_specs=[x_spec] + param_specs,
        out_specs=(enc_spec, dec_spec),
        compiler_params=pltpu.CompilerParams(
            dimension_semantics=("parallel",),   # shard batch tiles over TCs
            vmem_limit_bytes=vmem_limit),
        cost_estimate=cost,
    )(x_bf, *padded)

    # Slice away lane/batch padding (fused inside the jit).
    return enc_p[:N, :code_dim], dec_p[:N, :input_dim]


def autoencoder_forward(x, prepared, code_dim, *, desired_tile=512,
                        min_grid=2):
    """prepared: output of prepare_params()."""
    tile_n = _pick_tile_n(x.shape[0], desired=desired_tile, min_grid=min_grid)
    return _autoencoder_forward_impl(x, prepared, code_dim=code_dim,
                                     tile_n=tile_n)


def init_linear_params(key, in_dim, out_dim):
    """PyTorch-style uniform(-1/sqrt(fan_in), 1/sqrt(fan_in)); W stored (in, out)."""
    k_w, k_b = jax.random.split(key)
    bound = 1.0 / jnp.sqrt(jnp.float32(in_dim))
    w = jax.random.uniform(k_w, (in_dim, out_dim), jnp.float32, -bound, bound)
    b = jax.random.uniform(k_b, (1, out_dim), jnp.float32, -bound, bound)
    return w, b


def reference_forward(x, params, matmul_dtype=jnp.float32):
    """Plain-JAX reference.  matmul_dtype=bf16 mirrors the kernel's MXU path."""
    f32 = jnp.float32

    def linear(h, w, b):
        return jnp.dot(h.astype(matmul_dtype), w.astype(matmul_dtype),
                       preferred_element_type=f32) + b

    h = x.astype(f32)
    for i, (w, b) in enumerate(params[:4]):
        h = linear(h, w, b)
        if i < 3:
            h = jnp.maximum(h, 0.0)
    encoded = h
    d = encoded
    for i, (w, b) in enumerate(params[4:]):
        d = linear(d, w, b)
        if i < 3:
            d = jnp.maximum(d, 0.0)
    return encoded, jax.nn.sigmoid(d)


if __name__ == "__main__":
    # Small synthetic shapes consistent with the module's structure
    # (input_dim -> [500, 500, 200, 10] scaled down; batch large enough to
    # exercise the batch grid / both TensorCores on v7x).
    batch = 256
    input_dim = 64
    hidden_dims = [64, 64, 32, 16]

    enc_dims = [input_dim] + hidden_dims
    dec_dims = [hidden_dims[3], hidden_dims[2], hidden_dims[1],
                hidden_dims[0], input_dim]

    key = jax.random.PRNGKey(0)
    keys = jax.random.split(key, 9)

    params = []
    for i in range(4):
        params.append(init_linear_params(keys[i], enc_dims[i], enc_dims[i + 1]))
    for i in range(4):
        params.append(init_linear_params(keys[4 + i], dec_dims[i], dec_dims[i + 1]))

    x = jax.random.uniform(keys[8], (batch, input_dim), jnp.float32)

    # One-time weight prep (padding + bf16 cast) hoisted out of the forward.
    prepared, code_dim = prepare_params(params)
    jax.block_until_ready(prepared)

    encoded, decoded = autoencoder_forward(x, prepared, code_dim)
    jax.block_until_ready((encoded, decoded))

    assert encoded.shape == (batch, hidden_dims[3])
    assert decoded.shape == (batch, input_dim)

    # Tight check vs a reference using the same bf16 matmul operands.
    enc_bf, dec_bf = reference_forward(x, params, matmul_dtype=jnp.bfloat16)
    assert jnp.allclose(encoded, enc_bf, atol=1e-2, rtol=1e-2)
    assert jnp.allclose(decoded, dec_bf, atol=1e-2, rtol=1e-2)

    # Loose semantic check vs the full-f32 reference (PyTorch-equivalent math;
    # bf16 MXU operands give ~1e-2-level differences by design).
    enc_f32, dec_f32 = reference_forward(x, params, matmul_dtype=jnp.float32)
    assert jnp.allclose(encoded, enc_f32, atol=6e-2, rtol=6e-2)
    assert jnp.allclose(decoded, dec_f32, atol=6e-2, rtol=6e-2)

    print("KERNEL_OK")
</pallas_src>

<mosaic_0001>
module attributes {stable_mosaic.version = 11 : i64} {
  func.func @autoencoder_kernel(%arg0: i32, %arg1: memref<128x128xbf16, #tpu.memory_space<vmem>>, %arg2: memref<128x128xbf16, #tpu.memory_space<vmem>>, %arg3: memref<1x128xf32, #tpu.memory_space<vmem>>, %arg4: memref<128x128xbf16, #tpu.memory_space<vmem>>, %arg5: memref<1x128xf32, #tpu.memory_space<vmem>>, %arg6: memref<128x128xbf16, #tpu.memory_space<vmem>>, %arg7: memref<1x128xf32, #tpu.memory_space<vmem>>, %arg8: memref<128x128xbf16, #tpu.memory_space<vmem>>, %arg9: memref<1x128xf32, #tpu.memory_space<vmem>>, %arg10: memref<128x128xbf16, #tpu.memory_space<vmem>>, %arg11: memref<1x128xf32, #tpu.memory_space<vmem>>, %arg12: memref<128x128xbf16, #tpu.memory_space<vmem>>, %arg13: memref<1x128xf32, #tpu.memory_space<vmem>>, %arg14: memref<128x128xbf16, #tpu.memory_space<vmem>>, %arg15: memref<1x128xf32, #tpu.memory_space<vmem>>, %arg16: memref<128x128xbf16, #tpu.memory_space<vmem>>, %arg17: memref<1x128xf32, #tpu.memory_space<vmem>>, %arg18: memref<128x128xf32, #tpu.memory_space<vmem>>, %arg19: memref<128x128xf32, #tpu.memory_space<vmem>>) attributes {dimension_semantics = [#tpu.dimension_semantics<parallel>], iteration_bounds = array<i64: 2>, scalar_prefetch = 0 : i64, scratch_operands = 0 : i64, tpu.core_type = #tpu.core_type<tc>, window_params = [{transform_indices = @transform_0, window_bounds = array<i64: 128, 128>}, {pipeline_mode = #tpu.pipeline_mode<synchronous>, transform_indices = @transform_1, window_bounds = array<i64: 128, 128>}, {pipeline_mode = #tpu.pipeline_mode<synchronous>, transform_indices = @transform_2, window_bounds = array<i64: 1, 128>}, {pipeline_mode = #tpu.pipeline_mode<synchronous>, transform_indices = @transform_3, window_bounds = array<i64: 128, 128>}, {pipeline_mode = #tpu.pipeline_mode<synchronous>, transform_indices = @transform_4, window_bounds = array<i64: 1, 128>}, {pipeline_mode = #tpu.pipeline_mode<synchronous>, transform_indices = @transform_5, window_bounds = array<i64: 128, 128>}, {pipeline_mode = #tpu.pipeline_mode<synchronous>, transform_indices = @transform_6, window_bounds = array<i64: 1, 128>}, {pipeline_mode = #tpu.pipeline_mode<synchronous>, transform_indices = @transform_7, window_bounds = array<i64: 128, 128>}, {pipeline_mode = #tpu.pipeline_mode<synchronous>, transform_indices = @transform_8, window_bounds = array<i64: 1, 128>}, {pipeline_mode = #tpu.pipeline_mode<synchronous>, transform_indices = @transform_9, window_bounds = array<i64: 128, 128>}, {pipeline_mode = #tpu.pipeline_mode<synchronous>, transform_indices = @transform_10, window_bounds = array<i64: 1, 128>}, {pipeline_mode = #tpu.pipeline_mode<synchronous>, transform_indices = @transform_11, window_bounds = array<i64: 128, 128>}, {pipeline_mode = #tpu.pipeline_mode<synchronous>, transform_indices = @transform_12, window_bounds = array<i64: 1, 128>}, {pipeline_mode = #tpu.pipeline_mode<synchronous>, transform_indices = @transform_13, window_bounds = array<i64: 128, 128>}, {pipeline_mode = #tpu.pipeline_mode<synchronous>, transform_indices = @transform_14, window_bounds = array<i64: 1, 128>}, {pipeline_mode = #tpu.pipeline_mode<synchronous>, transform_indices = @transform_15, window_bounds = array<i64: 128, 128>}, {pipeline_mode = #tpu.pipeline_mode<synchronous>, transform_indices = @transform_16, window_bounds = array<i64: 1, 128>}, {transform_indices = @transform_17, window_bounds = array<i64: 128, 128>}, {transform_indices = @transform_18, window_bounds = array<i64: 128, 128>}]} {
    %c0 = arith.constant 0 : index
    %c0_0 = arith.constant 0 : index
    %0 = vector.load %arg1[%c0, %c0_0] : memref<128x128xbf16, #tpu.memory_space<vmem>>, vector<128x128xbf16>
    %c0_1 = arith.constant 0 : index
    %c0_2 = arith.constant 0 : index
    %1 = vector.load %arg2[%c0_1, %c0_2] : memref<128x128xbf16, #tpu.memory_space<vmem>>, vector<128x128xbf16>
    %cst = arith.constant dense<0.000000e+00> : vector<128x128xf32>
    %2 = tpu.matmul %0, %1, %cst {dimension_numbers = #tpu.dot_dimension_numbers<[1], [0], [0], [1], [0, 0, 1, 1], [], []>} : vector<128x128xbf16>, vector<128x128xbf16>, vector<128x128xf32> -> vector<128x128xf32>
    %c0_3 = arith.constant 0 : index
    %c0_4 = arith.constant 0 : index
    %3 = vector.load %arg3[%c0_3, %c0_4] : memref<1x128xf32, #tpu.memory_space<vmem>>, vector<1x128xf32>
    %4 = vector.broadcast %3 : vector<1x128xf32> to vector<128x128xf32>
    %5 = arith.addf %2, %4 : vector<128x128xf32>
    %cst_5 = arith.constant 0.000000e+00 : f32
    %6 = vector.broadcast %cst_5 : f32 to vector<128x128xf32>
    %7 = arith.maximumf %5, %6 : vector<128x128xf32>
    %8 = arith.truncf %7 : vector<128x128xf32> to vector<128x128xbf16>
    %c0_6 = arith.constant 0 : index
    %c0_7 = arith.constant 0 : index
    %9 = vector.load %arg4[%c0_6, %c0_7] : memref<128x128xbf16, #tpu.memory_space<vmem>>, vector<128x128xbf16>
    %cst_8 = arith.constant dense<0.000000e+00> : vector<128x128xf32>
    %10 = tpu.matmul %8, %9, %cst_8 {dimension_numbers = #tpu.dot_dimension_numbers<[1], [0], [0], [1], [0, 0, 1, 1], [], []>} : vector<128x128xbf16>, vector<128x128xbf16>, vector<128x128xf32> -> vector<128x128xf32>
    %c0_9 = arith.constant 0 : index
    %c0_10 = arith.constant 0 : index
    %11 = vector.load %arg5[%c0_9, %c0_10] : memref<1x128xf32, #tpu.memory_space<vmem>>, vector<1x128xf32>
    %12 = vector.broadcast %11 : vector<1x128xf32> to vector<128x128xf32>
    %13 = arith.addf %10, %12 : vector<128x128xf32>
    %cst_11 = arith.constant 0.000000e+00 : f32
    %14 = vector.broadcast %cst_11 : f32 to vector<128x128xf32>
    %15 = arith.maximumf %13, %14 : vector<128x128xf32>
    %16 = arith.truncf %15 : vector<128x128xf32> to vector<128x128xbf16>
    %c0_12 = arith.constant 0 : index
    %c0_13 = arith.constant 0 : index
    %17 = vector.load %arg6[%c0_12, %c0_13] : memref<128x128xbf16, #tpu.memory_space<vmem>>, vector<128x128xbf16>
    %cst_14 = arith.constant dense<0.000000e+00> : vector<128x128xf32>
    %18 = tpu.matmul %16, %17, %cst_14 {dimension_numbers = #tpu.dot_dimension_numbers<[1], [0], [0], [1], [0, 0, 1, 1], [], []>} : vector<128x128xbf16>, vector<128x128xbf16>, vector<128x128xf32> -> vector<128x128xf32>
    %c0_15 = arith.constant 0 : index
    %c0_16 = arith.constant 0 : index
    %19 = vector.load %arg7[%c0_15, %c0_16] : memref<1x128xf32, #tpu.memory_space<vmem>>, vector<1x128xf32>
    %20 = vector.broadcast %19 : vector<1x128xf32> to vector<128x128xf32>
    %21 = arith.addf %18, %20 : vector<128x128xf32>
    %cst_17 = arith.constant 0.000000e+00 : f32
    %22 = vector.broadcast %cst_17 : f32 to vector<128x128xf32>
    %23 = arith.maximumf %21, %22 : vector<128x128xf32>
    %24 = arith.truncf %23 : vector<128x128xf32> to vector<128x128xbf16>
    %c0_18 = arith.constant 0 : index
    %c0_19 = arith.constant 0 : index
    %25 = vector.load %arg8[%c0_18, %c0_19] : memref<128x128xbf16, #tpu.memory_space<vmem>>, vector<128x128xbf16>
    %cst_20 = arith.constant dense<0.000000e+00> : vector<128x128xf32>
    %26 = tpu.matmul %24, %25, %cst_20 {dimension_numbers = #tpu.dot_dimension_numbers<[1], [0], [0], [1], [0, 0, 1, 1], [], []>} : vector<128x128xbf16>, vector<128x128xbf16>, vector<128x128xf32> -> vector<128x128xf32>
    %c0_21 = arith.constant 0 : index
    %c0_22 = arith.constant 0 : index
    %27 = vector.load %arg9[%c0_21, %c0_22] : memref<1x128xf32, #tpu.memory_space<vmem>>, vector<1x128xf32>
    %28 = vector.broadcast %27 : vector<1x128xf32> to vector<128x128xf32>
    %29 = arith.addf %26, %28 : vector<128x128xf32>
    %c0_23 = arith.constant 0 : index
    %c0_24 = arith.constant 0 : index
    %30 = vector.load %arg18[%c0_23, %c0_24] : memref<128x128xf32, #tpu.memory_space<vmem>>, vector<128x128xf32>
    tpu.vector_store %arg18[%c0_23, %c0_24], %29 {strides = array<i32>} : memref<128x128xf32, #tpu.memory_space<vmem>>, vector<128x128xf32>,
    %31 = arith.truncf %29 : vector<128x128xf32> to vector<128x128xbf16>
    %c0_25 = arith.constant 0 : index
    %c0_26 = arith.constant 0 : index
    %32 = vector.load %arg10[%c0_25, %c0_26] : memref<128x128xbf16, #tpu.memory_space<vmem>>, vector<128x128xbf16>
    %cst_27 = arith.constant dense<0.000000e+00> : vector<128x128xf32>
    %33 = tpu.matmul %31, %32, %cst_27 {dimension_numbers = #tpu.dot_dimension_numbers<[1], [0], [0], [1], [0, 0, 1, 1], [], []>} : vector<128x128xbf16>, vector<128x128xbf16>, vector<128x128xf32> -> vector<128x128xf32>
    %c0_28 = arith.constant 0 : index
    %c0_29 = arith.constant 0 : index
    %34 = vector.load %arg11[%c0_28, %c0_29] : memref<1x128xf32, #tpu.memory_space<vmem>>, vector<1x128xf32>
    %35 = vector.broadcast %34 : vector<1x128xf32> to vector<128x128xf32>
    %36 = arith.addf %33, %35 : vector<128x128xf32>
    %cst_30 = arith.constant 0.000000e+00 : f32
    %37 = vector.broadcast %cst_30 : f32 to vector<128x128xf32>
    %38 = arith.maximumf %36, %37 : vector<128x128xf32>
    %39 = arith.truncf %38 : vector<128x128xf32> to vector<128x128xbf16>
    %c0_31 = arith.constant 0 : index
    %c0_32 = arith.constant 0 : index
    %40 = vector.load %arg12[%c0_31, %c0_32] : memref<128x128xbf16, #tpu.memory_space<vmem>>, vector<128x128xbf16>
    %cst_33 = arith.constant dense<0.000000e+00> : vector<128x128xf32>
    %41 = tpu.matmul %39, %40, %cst_33 {dimension_numbers = #tpu.dot_dimension_numbers<[1], [0], [0], [1], [0, 0, 1, 1], [], []>} : vector<128x128xbf16>, vector<128x128xbf16>, vector<128x128xf32> -> vector<128x128xf32>
    %c0_34 = arith.constant 0 : index
    %c0_35 = arith.constant 0 : index
    %42 = vector.load %arg13[%c0_34, %c0_35] : memref<1x128xf32, #tpu.memory_space<vmem>>, vector<1x128xf32>
    %43 = vector.broadcast %42 : vector<1x128xf32> to vector<128x128xf32>
    %44 = arith.addf %41, %43 : vector<128x128xf32>
    %cst_36 = arith.constant 0.000000e+00 : f32
    %45 = vector.broadcast %cst_36 : f32 to vector<128x128xf32>
    %46 = arith.maximumf %44, %45 : vector<128x128xf32>
    %47 = arith.truncf %46 : vector<128x128xf32> to vector<128x128xbf16>
    %c0_37 = arith.constant 0 : index
    %c0_38 = arith.constant 0 : index
    %48 = vector.load %arg14[%c0_37, %c0_38] : memref<128x128xbf16, #tpu.memory_space<vmem>>, vector<128x128xbf16>
    %cst_39 = arith.constant dense<0.000000e+00> : vector<128x128xf32>
    %49 = tpu.matmul %47, %48, %cst_39 {dimension_numbers = #tpu.dot_dimension_numbers<[1], [0], [0], [1], [0, 0, 1, 1], [], []>} : vector<128x128xbf16>, vector<128x128xbf16>, vector<128x128xf32> -> vector<128x128xf32>
    %c0_40 = arith.constant 0 : index
    %c0_41 = arith.constant 0 : index
    %50 = vector.load %arg15[%c0_40, %c0_41] : memref<1x128xf32, #tpu.memory_space<vmem>>, vector<1x128xf32>
    %51 = vector.broadcast %50 : vector<1x128xf32> to vector<128x128xf32>
    %52 = arith.addf %49, %51 : vector<128x128xf32>
    %cst_42 = arith.constant 0.000000e+00 : f32
    %53 = vector.broadcast %cst_42 : f32 to vector<128x128xf32>
    %54 = arith.maximumf %52, %53 : vector<128x128xf32>
    %55 = arith.truncf %54 : vector<128x128xf32> to vector<128x128xbf16>
    %c0_43 = arith.constant 0 : index
    %c0_44 = arith.constant 0 : index
    %56 = vector.load %arg16[%c0_43, %c0_44] : memref<128x128xbf16, #tpu.memory_space<vmem>>, vector<128x128xbf16>
    %cst_45 = arith.constant dense<0.000000e+00> : vector<128x128xf32>
    %57 = tpu.matmul %55, %56, %cst_45 {dimension_numbers = #tpu.dot_dimension_numbers<[1], [0], [0], [1], [0, 0, 1, 1], [], []>} : vector<128x128xbf16>, vector<128x128xbf16>, vector<128x128xf32> -> vector<128x128xf32>
    %c0_46 = arith.constant 0 : index
    %c0_47 = arith.constant 0 : index
    %58 = vector.load %arg17[%c0_46, %c0_47] : memref<1x128xf32, #tpu.memory_space<vmem>>, vector<1x128xf32>
    %59 = vector.broadcast %58 : vector<1x128xf32> to vector<128x128xf32>
    %60 = arith.addf %57, %59 : vector<128x128xf32>
    %61 = arith.negf %60 : vector<128x128xf32>
    %62 = math.exp %61 : vector<128x128xf32>
    %cst_48 = arith.constant 1.000000e+00 : f32
    %63 = vector.broadcast %cst_48 : f32 to vector<128x128xf32>
    %64 = arith.addf %63, %62 : vector<128x128xf32>
    %65 = arith.divf %63, %64 : vector<128x128xf32>
    %c0_49 = arith.constant 0 : index
    %c0_50 = arith.constant 0 : index
    %66 = vector.load %arg19[%c0_49, %c0_50] : memref<128x128xf32, #tpu.memory_space<vmem>>, vector<128x128xf32>
    tpu.vector_store %arg19[%c0_49, %c0_50], %65 {strides = array<i32>} : memref<128x128xf32, #tpu.memory_space<vmem>>, vector<128x128xf32>,
    return
  }
  func.func @transform_0(%arg0: i32) -> (i32, i32) {
    %c0_i32 = arith.constant 0 : i32
    %c0_i32_0 = arith.constant 0 : i32
    return %arg0, %c0_i32 : i32, i32
  }
  func.func @transform_1(%arg0: i32) -> (i32, i32) {
    %c0_i32 = arith.constant 0 : i32
    %c0_i32_0 = arith.constant 0 : i32
    %c0_i32_1 = arith.constant 0 : i32
    return %c0_i32, %c0_i32_0 : i32, i32
  }
  func.func @transform_2(%arg0: i32) -> (i32, i32) {
    %c0_i32 = arith.constant 0 : i32
    %c0_i32_0 = arith.constant 0 : i32
    %c0_i32_1 = arith.constant 0 : i32
    return %c0_i32, %c0_i32_0 : i32, i32
  }
  func.func @transform_3(%arg0: i32) -> (i32, i32) {
    %c0_i32 = arith.constant 0 : i32
    %c0_i32_0 = arith.constant 0 : i32
    %c0_i32_1 = arith.constant 0 : i32
    return %c0_i32, %c0_i32_0 : i32, i32
  }
  func.func @transform_4(%arg0: i32) -> (i32, i32) {
    %c0_i32 = arith.constant 0 : i32
    %c0_i32_0 = arith.constant 0 : i32
    %c0_i32_1 = arith.constant 0 : i32
    return %c0_i32, %c0_i32_0 : i32, i32
  }
  func.func @transform_5(%arg0: i32) -> (i32, i32) {
    %c0_i32 = arith.constant 0 : i32
    %c0_i32_0 = arith.constant 0 : i32
    %c0_i32_1 = arith.constant 0 : i32
    return %c0_i32, %c0_i32_0 : i32, i32
  }
  func.func @transform_6(%arg0: i32) -> (i32, i32) {
    %c0_i32 = arith.constant 0 : i32
    %c0_i32_0 = arith.constant 0 : i32
    %c0_i32_1 = arith.constant 0 : i32
    return %c0_i32, %c0_i32_0 : i32, i32
  }
  func.func @transform_7(%arg0: i32) -> (i32, i32) {
    %c0_i32 = arith.constant 0 : i32
    %c0_i32_0 = arith.constant 0 : i32
    %c0_i32_1 = arith.constant 0 : i32
    return %c0_i32, %c0_i32_0 : i32, i32
  }
  func.func @transform_8(%arg0: i32) -> (i32, i32) {
    %c0_i32 = arith.constant 0 : i32
    %c0_i32_0 = arith.constant 0 : i32
    %c0_i32_1 = arith.constant 0 : i32
    return %c0_i32, %c0_i32_0 : i32, i32
  }
  func.func @transform_9(%arg0: i32) -> (i32, i32) {
    %c0_i32 = arith.constant 0 : i32
    %c0_i32_0 = arith.constant 0 : i32
    %c0_i32_1 = arith.constant 0 : i32
    return %c0_i32, %c0_i32_0 : i32, i32
  }
  func.func @transform_10(%arg0: i32) -> (i32, i32) {
    %c0_i32 = arith.constant 0 : i32
    %c0_i32_0 = arith.constant 0 : i32
    %c0_i32_1 = arith.constant 0 : i32
    return %c0_i32, %c0_i32_0 : i32, i32
  }
  func.func @transform_11(%arg0: i32) -> (i32, i32) {
    %c0_i32 = arith.constant 0 : i32
    %c0_i32_0 = arith.constant 0 : i32
    %c0_i32_1 = arith.constant 0 : i32
    return %c0_i32, %c0_i32_0 : i32, i32
  }
  func.func @transform_12(%arg0: i32) -> (i32, i32) {
    %c0_i32 = arith.constant 0 : i32
    %c0_i32_0 = arith.constant 0 : i32
    %c0_i32_1 = arith.constant 0 : i32
    return %c0_i32, %c0_i32_0 : i32, i32
  }
  func.func @transform_13(%arg0: i32) -> (i32, i32) {
    %c0_i32 = arith.constant 0 : i32
    %c0_i32_0 = arith.constant 0 : i32
    %c0_i32_1 = arith.constant 0 : i32
    return %c0_i32, %c0_i32_0 : i32, i32
  }
  func.func @transform_14(%arg0: i32) -> (i32, i32) {
    %c0_i32 = arith.constant 0 : i32
    %c0_i32_0 = arith.constant 0 : i32
    %c0_i32_1 = arith.constant 0 : i32
    return %c0_i32, %c0_i32_0 : i32, i32
  }
  func.func @transform_15(%arg0: i32) -> (i32, i32) {
    %c0_i32 = arith.constant 0 : i32
    %c0_i32_0 = arith.constant 0 : i32
    %c0_i32_1 = arith.constant 0 : i32
    return %c0_i32, %c0_i32_0 : i32, i32
  }
  func.func @transform_16(%arg0: i32) -> (i32, i32) {
    %c0_i32 = arith.constant 0 : i32
    %c0_i32_0 = arith.constant 0 : i32
    %c0_i32_1 = arith.constant 0 : i32
    return %c0_i32, %c0_i32_0 : i32, i32
  }
  func.func @transform_17(%arg0: i32) -> (i32, i32) {
    %c0_i32 = arith.constant 0 : i32
    %c0_i32_0 = arith.constant 0 : i32
    return %arg0, %c0_i32 : i32, i32
  }
  func.func @transform_18(%arg0: i32) -> (i32, i32) {
    %c0_i32 = arith.constant 0 : i32
    %c0_i32_0 = arith.constant 0 : i32
    return %arg0, %c0_i32 : i32, i32
  }
}

</mosaic_0001>

<llo_original>
// kernel: _autoencoder_forward_impl.1
$region0: #{_autoencoder_forward_impl.1}
  #allocation0 [shape = 'u32[]', space=smem, size = 0x4, offset = 0x4, fixed_abs, tag = 'smem constant byte address 0x4 - core index']
  #allocation1 [shape = 'u32[144,128]{1,0:T(1,128)}', space=vmem, size = 0x12000, scoped, tag = 'internal scratch']
  %s0 = inlined_call_operand.vmem [shape: bf16[256,128], index: 0, kind: input, shape index: {}]
  %s1 = inlined_call_operand.vmem [shape: bf16[128,128], index: 1, kind: input, shape index: {}]
  %s2 = inlined_call_operand.vmem [shape: f32[1,128], index: 2, kind: input, shape index: {}]
  %s3 = inlined_call_operand.vmem [shape: bf16[128,128], index: 3, kind: input, shape index: {}]
  %s4 = inlined_call_operand.vmem [shape: f32[1,128], index: 4, kind: input, shape index: {}]
  %s5 = inlined_call_operand.vmem [shape: bf16[128,128], index: 5, kind: input, shape index: {}]
  %s6 = inlined_call_operand.vmem [shape: f32[1,128], index: 6, kind: input, shape index: {}]
  %s7 = inlined_call_operand.vmem [shape: bf16[128,128], index: 7, kind: input, shape index: {}]
  %s8 = inlined_call_operand.vmem [shape: f32[1,128], index: 8, kind: input, shape index: {}]
  %s9 = inlined_call_operand.vmem [shape: bf16[128,128], index: 9, kind: input, shape index: {}]
  %s10 = inlined_call_operand.vmem [shape: f32[1,128], index: 10, kind: input, shape index: {}]
  %s11 = inlined_call_operand.vmem [shape: bf16[128,128], index: 11, kind: input, shape index: {}]
  %s12 = inlined_call_operand.vmem [shape: f32[1,128], index: 12, kind: input, shape index: {}]
  %s13 = inlined_call_operand.vmem [shape: bf16[128,128], index: 13, kind: input, shape index: {}]
  %s14 = inlined_call_operand.vmem [shape: f32[1,128], index: 14, kind: input, shape index: {}]
  %s15 = inlined_call_operand.vmem [shape: bf16[128,128], index: 15, kind: input, shape index: {}]
  %s16 = inlined_call_operand.vmem [shape: f32[1,128], index: 16, kind: input, shape index: {}]
  %s17 = inlined_call_operand.vmem [shape: f32[256,128], index: 17, kind: output, shape index: {0}]
  %s18 = inlined_call_operand.vmem [shape: f32[256,128], index: 18, kind: output, shape index: {1}]
  %19 = xla_tuple %s17, %s18
  %s20 = sld [smem:[#allocation0]]
  $region109: #{_autoencoder_forward_impl.1} parent=0
    _
  %s22 = ssub.s32 1, %s20
  %s23 = scalar_select 0, %s22, %s20
  loop: start=0, step=1, limit=4
  $region2: #{_autoencoder_forward_impl.1} parent=0 // loop_pre_header
    _
  $region3: #{_autoencoder_forward_impl.1} parent=0 // loop_header
    %s25 = sphi 0, %s29
    %p26 = scmp.ge.s32.totalorder %s25, 4
    %s35 = sphi 0, %s37
    %s38 = sphi 0, %s35
    %s39 = sphi 0, %s38
    %s55 = sphi 0, %s39
    %s59 = sphi 0, %s59
    %s61 = sphi 0, %s59
    %s62 = sphi 0, %s61
    %s76 = sphi 0, %s62
    %s80 = sphi 0, %s80
    %s82 = sphi 0, %s80
    %s83 = sphi 0, %s82
    %s97 = sphi 0, %s83
    %s101 = sphi 0, %s101
    %s103 = sphi 0, %s101
    %s104 = sphi 0, %s103
    %s118 = sphi 0, %s104
    %s122 = sphi 0, %s122
    %s124 = sphi 0, %s122
    %s125 = sphi 0, %s124
    %s139 = sphi 0, %s125
    %s143 = sphi 0, %s143
    %s145 = sphi 0, %s143
    %s146 = sphi 0, %s145
    %s160 = sphi 0, %s146
    %s164 = sphi 0, %s164
    %s166 = sphi 0, %s164
    %s167 = sphi 0, %s166
    %s181 = sphi 0, %s167
    %s185 = sphi 0, %s185
    %s187 = sphi 0, %s185
    %s188 = sphi 0, %s187
    %s202 = sphi 0, %s188
    %s206 = sphi 0, %s206
    %s208 = sphi 0, %s206
    %s209 = sphi 0, %s208
    %s223 = sphi 0, %s209
    %s227 = sphi 0, %s227
    %s229 = sphi 0, %s227
    %s230 = sphi 0, %s229
    %s244 = sphi 0, %s230
    %s248 = sphi 0, %s248
    %s250 = sphi 0, %s248
    %s251 = sphi 0, %s250
    %s265 = sphi 0, %s251
    %s269 = sphi 0, %s269
    %s271 = sphi 0, %s269
    %s272 = sphi 0, %s271
    %s286 = sphi 0, %s272
    %s290 = sphi 0, %s290
    %s292 = sphi 0, %s290
    %s293 = sphi 0, %s292
    %s307 = sphi 0, %s293
    %s311 = sphi 0, %s311
    %s313 = sphi 0, %s311
    %s314 = sphi 0, %s313
    %s328 = sphi 0, %s314
    %s332 = sphi 0, %s332
    %s334 = sphi 0, %s332
    %s335 = sphi 0, %s334
    %s349 = sphi 0, %s335
    %s353 = sphi 0, %s353
    %s355 = sphi 0, %s353
    %s356 = sphi 0, %s355
    %s370 = sphi 0, %s356
    %s374 = sphi 0, %s374
    %s376 = sphi 0, %s374
    %s377 = sphi 0, %s376
    %s391 = sphi 0, %s377
    %s397 = sphi 0, %s399
    %s400 = sphi 0, %s397
    %s401 = sphi 0, %s400
    %s417 = sphi 0, %s401
    %s423 = sphi 0, %s425
    %s426 = sphi 0, %s423
    %s427 = sphi 0, %s426
    %s443 = sphi 0, %s427
  $region4: #{_autoencoder_forward_impl.1} parent=0 // loop_header_branch
    %28 = sbr.rel (%p26) target = $region8
  $region5: #{_autoencoder_forward_impl.1} parent=0 // loop_body
    %s30 = ssub.s32 %s25, 1
    %s31 = ssub.s32 %s25, 2
    %s32 = sadd.s32 %s25, 1
    %s33 = ssub.s32 %s25, %s32
    %p34 = scmp.eq.s32.totalorder %s33, 0
    %s36 = sadd.s32 %s35, 1
    %s37 = scalar_select %p34, %s35, %s36
    %p40 = pneg %p34
    %p41 = scmp.eq.s32.totalorder %s25, 1
    %p42 = por %p40, %p41
    %p43 = scmp.ne.s32.totalorder %s35, %s38
    %p44 = scmp.eq.s32.totalorder %s25, 0
    %p45 = por %p43, %p44
    %p46 = scmp.ne.s32.totalorder %s35, %s38
    %p47 = scmp.eq.s32.totalorder %s30, 1
    %p48 = por %p46, %p47
    %p49 = scmp.ne.s32.totalorder %s38, %s39
    %p50 = scmp.eq.s32.totalorder %s30, 0
    %p51 = por %p49, %p50
    %p52 = scmp.ne.s32.totalorder %s38, %s39
    %p53 = scmp.eq.s32.totalorder %s31, 1
    %p54 = por %p52, %p53
    %p56 = scmp.ne.s32.totalorder %s39, %s55
    %p57 = scmp.eq.s32.totalorder %s31, 0
    %p58 = por %p56, %p57
    %s60 = sadd.s32 %s59, 1
    %p63 = scmp.eq.s32.totalorder %s25, 1
    %p64 = scmp.ne.s32.totalorder %s59, %s61
    %p65 = scmp.eq.s32.totalorder %s25, 0
    %p66 = por %p64, %p65
    %p67 = scmp.ne.s32.totalorder %s59, %s61
    %p68 = scmp.eq.s32.totalorder %s30, 1
    %p69 = por %p67, %p68
    %p70 = scmp.ne.s32.totalorder %s61, %s62
    %p71 = scmp.eq.s32.totalorder %s30, 0
    %p72 = por %p70, %p71
    %p73 = scmp.ne.s32.totalorder %s61, %s62
    %p74 = scmp.eq.s32.totalorder %s31, 1
    %p75 = por %p73, %p74
    %p77 = scmp.ne.s32.totalorder %s62, %s76
    %p78 = scmp.eq.s32.totalorder %s31, 0
    %p79 = por %p77, %p78
    %s81 = sadd.s32 %s80, 1
    %p84 = scmp.eq.s32.totalorder %s25, 1
    %p85 = scmp.ne.s32.totalorder %s80, %s82
    %p86 = scmp.eq.s32.totalorder %s25, 0
    %p87 = por %p85, %p86
    %p88 = scmp.ne.s32.totalorder %s80, %s82
    %p89 = scmp.eq.s32.totalorder %s30, 1
    %p90 = por %p88, %p89
    %p91 = scmp.ne.s32.totalorder %s82, %s83
    %p92 = scmp.eq.s32.totalorder %s30, 0
    %p93 = por %p91, %p92
    %p94 = scmp.ne.s32.totalorder %s82, %s83
    %p95 = scmp.eq.s32.totalorder %s31, 1
    %p96 = por %p94, %p95
    %p98 = scmp.ne.s32.totalorder %s83, %s97
    %p99 = scmp.eq.s32.totalorder %s31, 0
    %p100 = por %p98, %p99
    %s102 = sadd.s32 %s101, 1
    %p105 = scmp.eq.s32.totalorder %s25, 1
    %p106 = scmp.ne.s32.totalorder %s101, %s103
    %p107 = scmp.eq.s32.totalorder %s25, 0
    %p108 = por %p106, %p107
    %p109 = scmp.ne.s32.totalorder %s101, %s103
    %p110 = scmp.eq.s32.totalorder %s30, 1
    %p111 = por %p109, %p110
    %p112 = scmp.ne.s32.totalorder %s103, %s104
    %p113 = scmp.eq.s32.totalorder %s30, 0
    %p114 = por %p112, %p113
    %p115 = scmp.ne.s32.totalorder %s103, %s104
    %p116 = scmp.eq.s32.totalorder %s31, 1
    %p117 = por %p115, %p116
    %p119 = scmp.ne.s32.totalorder %s104, %s118
    %p120 = scmp.eq.s32.totalorder %s31, 0
    %p121 = por %p119, %p120
    %s123 = sadd.s32 %s122, 1
    %p126 = scmp.eq.s32.totalorder %s25, 1
    %p127 = scmp.ne.s32.totalorder %s122, %s124
    %p128 = scmp.eq.s32.totalorder %s25, 0
    %p129 = por %p127, %p128
    %p130 = scmp.ne.s32.totalorder %s122, %s124
    %p131 = scmp.eq.s32.totalorder %s30, 1
    %p132 = por %p130, %p131
    %p133 = scmp.ne.s32.totalorder %s124, %s125
    %p134 = scmp.eq.s32.totalorder %s30, 0
    %p135 = por %p133, %p134
    %p136 = scmp.ne.s32.totalorder %s124, %s125
    %p137 = scmp.eq.s32.totalorder %s31, 1
    %p138 = por %p136, %p137
    %p140 = scmp.ne.s32.totalorder %s125, %s139
    %p141 = scmp.eq.s32.totalorder %s31, 0
    %p142 = por %p140, %p141
    %s144 = sadd.s32 %s143, 1
    %p147 = scmp.eq.s32.totalorder %s25, 1
    %p148 = scmp.ne.s32.totalorder %s143, %s145
    %p149 = scmp.eq.s32.totalorder %s25, 0
    %p150 = por %p148, %p149
    %p151 = scmp.ne.s32.totalorder %s143, %s145
    %p152 = scmp.eq.s32.totalorder %s30, 1
    %p153 = por %p151, %p152
    %p154 = scmp.ne.s32.totalorder %s145, %s146
    %p155 = scmp.eq.s32.totalorder %s30, 0
    %p156 = por %p154, %p155
    %p157 = scmp.ne.s32.totalorder %s145, %s146
    %p158 = scmp.eq.s32.totalorder %s31, 1
    %p159 = por %p157, %p158
    %p161 = scmp.ne.s32.totalorder %s146, %s160
    %p162 = scmp.eq.s32.totalorder %s31, 0
    %p163 = por %p161, %p162
    %s165 = sadd.s32 %s164, 1
    %p168 = scmp.eq.s32.totalorder %s25, 1
    %p169 = scmp.ne.s32.totalorder %s164, %s166
    %p170 = scmp.eq.s32.totalorder %s25, 0
    %p171 = por %p169, %p170
    %p172 = scmp.ne.s32.totalorder %s164, %s166
    %p173 = scmp.eq.s32.totalorder %s30, 1
    %p174 = por %p172, %p173
    %p175 = scmp.ne.s32.totalorder %s166, %s167
    %p176 = scmp.eq.s32.totalorder %s30, 0
    %p177 = por %p175, %p176
    %p178 = scmp.ne.s32.totalorder %s166, %s167
    %p179 = scmp.eq.s32.totalorder %s31, 1
    %p180 = por %p178, %p179
    %p182 = scmp.ne.s32.totalorder %s167, %s181
    %p183 = scmp.eq.s32.totalorder %s31, 0
    %p184 = por %p182, %p183
    %s186 = sadd.s32 %s185, 1
    %p189 = scmp.eq.s32.totalorder %s25, 1
    %p190 = scmp.ne.s32.totalorder %s185, %s187
    %p191 = scmp.eq.s32.totalorder %s25, 0
    %p192 = por %p190, %p191
    %p193 = scmp.ne.s32.totalorder %s185, %s187
    %p194 = scmp.eq.s32.totalorder %s30, 1
    %p195 = por %p193, %p194
    %p196 = scmp.ne.s32.totalorder %s187, %s188
    %p197 = scmp.eq.s32.totalorder %s30, 0
    %p198 = por %p196, %p197
    %p199 = scmp.ne.s32.totalorder %s187, %s188
    %p200 = scmp.eq.s32.totalorder %s31, 1
    %p201 = por %p199, %p200
    %p203 = scmp.ne.s32.totalorder %s188, %s202
    %p204 = scmp.eq.s32.totalorder %s31, 0
    %p205 = por %p203, %p204
    %s207 = sadd.s32 %s206, 1
    %p210 = scmp.eq.s32.totalorder %s25, 1
    %p211 = scmp.ne.s32.totalorder %s206, %s208
    %p212 = scmp.eq.s32.totalorder %s25, 0
    %p213 = por %p211, %p212
    %p214 = scmp.ne.s32.totalorder %s206, %s208
    %p215 = scmp.eq.s32.totalorder %s30, 1
    %p216 = por %p214, %p215
    %p217 = scmp.ne.s32.totalorder %s208, %s209
    %p218 = scmp.eq.s32.totalorder %s30, 0
    %p219 = por %p217, %p218
    %p220 = scmp.ne.s32.totalorder %s208, %s209
    %p221 = scmp.eq.s32.totalorder %s31, 1
    %p222 = por %p220, %p221
    %p224 = scmp.ne.s32.totalorder %s209, %s223
    %p225 = scmp.eq.s32.totalorder %s31, 0
    %p226 = por %p224, %p225
    %s228 = sadd.s32 %s227, 1
    %p231 = scmp.eq.s32.totalorder %s25, 1
    %p232 = scmp.ne.s32.totalorder %s227, %s229
    %p233 = scmp.eq.s32.totalorder %s25, 0
    %p234 = por %p232, %p233
    %p235 = scmp.ne.s32.totalorder %s227, %s229
    %p236 = scmp.eq.s32.totalorder %s30, 1
    %p237 = por %p235, %p236
    %p238 = scmp.ne.s32.totalorder %s229, %s230
    %p239 = scmp.eq.s32.totalorder %s30, 0
    %p240 = por %p238, %p239
    %p241 = scmp.ne.s32.totalorder %s229, %s230
    %p242 = scmp.eq.s32.totalorder %s31, 1
    %p243 = por %p241, %p242
    %p245 = scmp.ne.s32.totalorder %s230, %s244
    %p246 = scmp.eq.s32.totalorder %s31, 0
    %p247 = por %p245, %p246
    %s249 = sadd.s32 %s248, 1
    %p252 = scmp.eq.s32.totalorder %s25, 1
    %p253 = scmp.ne.s32.totalorder %s248, %s250
    %p254 = scmp.eq.s32.totalorder %s25, 0
    %p255 = por %p253, %p254
    %p256 = scmp.ne.s32.totalorder %s248, %s250
    %p257 = scmp.eq.s32.totalorder %s30, 1
    %p258 = por %p256, %p257
    %p259 = scmp.ne.s32.totalorder %s250, %s251
    %p260 = scmp.eq.s32.totalorder %s30, 0
    %p261 = por %p259, %p260
    %p262 = scmp.ne.s32.totalorder %s250, %s251
    %p263 = scmp.eq.s32.totalorder %s31, 1
    %p264 = por %p262, %p263
    %p266 = scmp.ne.s32.totalorder %s251, %s265
    %p267 = scmp.eq.s32.totalorder %s31, 0
    %p268 = por %p266, %p267
    %s270 = sadd.s32 %s269, 1
    %p273 = scmp.eq.s32.totalorder %s25, 1
    %p274 = scmp.ne.s32.totalorder %s269, %s271
    %p275 = scmp.eq.s32.totalorder %s25, 0
    %p276 = por %p274, %p275
    %p277 = scmp.ne.s32.totalorder %s269, %s271
    %p278 = scmp.eq.s32.totalorder %s30, 1
    %p279 = por %p277, %p278
    %p280 = scmp.ne.s32.totalorder %s271, %s272
    %p281 = scmp.eq.s32.totalorder %s30, 0
    %p282 = por %p280, %p281
    %p283 = scmp.ne.s32.totalorder %s271, %s272
    %p284 = scmp.eq.s32.totalorder %s31, 1
    %p285 = por %p283, %p284
    %p287 = scmp.ne.s32.totalorder %s272, %s286
    %p288 = scmp.eq.s32.totalorder %s31, 0
    %p289 = por %p287, %p288
    %s291 = sadd.s32 %s290, 1
    %p294 = scmp.eq.s32.totalorder %s25, 1
    %p295 = scmp.ne.s32.totalorder %s290, %s292
    %p296 = scmp.eq.s32.totalorder %s25, 0
    %p297 = por %p295, %p296
    %p298 = scmp.ne.s32.totalorder %s290, %s292
    %p299 = scmp.eq.s32.totalorder %s30, 1
    %p300 = por %p298, %p299
    %p301 = scmp.ne.s32.totalorder %s292, %s293
    %p302 = scmp.eq.s32.totalorder %s30, 0
    %p303 = por %p301, %p302
    %p304 = scmp.ne.s32.totalorder %s292, %s293
    %p305 = scmp.eq.s32.totalorder %s31, 1
    %p306 = por %p304, %p305
    %p308 = scmp.ne.s32.totalorder %s293, %s307
    %p309 = scmp.eq.s32.totalorder %s31, 0
    %p310 = por %p308, %p309
    %s312 = sadd.s32 %s311, 1
    %p315 = scmp.eq.s32.totalorder %s25, 1
    %p316 = scmp.ne.s32.totalorder %s311, %s313
    %p317 = scmp.eq.s32.totalorder %s25, 0
    %p318 = por %p316, %p317
    %p319 = scmp.ne.s32.totalorder %s311, %s313
    %p320 = scmp.eq.s32.totalorder %s30, 1
    %p321 = por %p319, %p320
    %p322 = scmp.ne.s32.totalorder %s313, %s314
    %p323 = scmp.eq.s32.totalorder %s30, 0
    %p324 = por %p322, %p323
    %p325 = scmp.ne.s32.totalorder %s313, %s314
    %p326 = scmp.eq.s32.totalorder %s31, 1
    %p327 = por %p325, %p326
    %p329 = scmp.ne.s32.totalorder %s314, %s328
    %p330 = scmp.eq.s32.totalorder %s31, 0
    %p331 = por %p329, %p330
    %s333 = sadd.s32 %s332, 1
    %p336 = scmp.eq.s32.totalorder %s25, 1
    %p337 = scmp.ne.s32.totalorder %s332, %s334
    %p338 = scmp.eq.s32.totalorder %s25, 0
    %p339 = por %p337, %p338
    %p340 = scmp.ne.s32.totalorder %s332, %s334
    %p341 = scmp.eq.s32.totalorder %s30, 1
    %p342 = por %p340, %p341
    %p343 = scmp.ne.s32.totalorder %s334, %s335
    %p344 = scmp.eq.s32.totalorder %s30, 0
    %p345 = por %p343, %p344
    %p346 = scmp.ne.s32.totalorder %s334, %s335
    %p347 = scmp.eq.s32.totalorder %s31, 1
    %p348 = por %p346, %p347
    %p350 = scmp.ne.s32.totalorder %s335, %s349
    %p351 = scmp.eq.s32.totalorder %s31, 0
    %p352 = por %p350, %p351
    %s354 = sadd.s32 %s353, 1
    %p357 = scmp.eq.s32.totalorder %s25, 1
    %p358 = scmp.ne.s32.totalorder %s353, %s355
    %p359 = scmp.eq.s32.totalorder %s25, 0
    %p360 = por %p358, %p359
    %p361 = scmp.ne.s32.totalorder %s353, %s355
    %p362 = scmp.eq.s32.totalorder %s30, 1
    %p363 = por %p361, %p362
    %p364 = scmp.ne.s32.totalorder %s355, %s356
    %p365 = scmp.eq.s32.totalorder %s30, 0
    %p366 = por %p364, %p365
    %p367 = scmp.ne.s32.totalorder %s355, %s356
    %p368 = scmp.eq.s32.totalorder %s31, 1
    %p369 = por %p367, %p368
    %p371 = scmp.ne.s32.totalorder %s356, %s370
    %p372 = scmp.eq.s32.totalorder %s31, 0
    %p373 = por %p371, %p372
    %s375 = sadd.s32 %s374, 1
    %p378 = scmp.eq.s32.totalorder %s25, 1
    %p379 = scmp.ne.s32.totalorder %s374, %s376
    %p380 = scmp.eq.s32.totalorder %s25, 0
    %p381 = por %p379, %p380
    %p382 = scmp.ne.s32.totalorder %s374, %s376
    %p383 = scmp.eq.s32.totalorder %s30, 1
    %p384 = por %p382, %p383
    %p385 = scmp.ne.s32.totalorder %s376, %s377
    %p386 = scmp.eq.s32.totalorder %s30, 0
    %p387 = por %p385, %p386
    %p388 = scmp.ne.s32.totalorder %s376, %s377
    %p389 = scmp.eq.s32.totalorder %s31, 1
    %p390 = por %p388, %p389
    %p392 = scmp.ne.s32.totalorder %s377, %s391
    %p393 = scmp.eq.s32.totalorder %s31, 0
    %p394 = por %p392, %p393
    %s395 = ssub.s32 %s25, %s32
    %p396 = scmp.eq.s32.totalorder %s395, 0
    %s398 = sadd.s32 %s397, 1
    %s399 = scalar_select %p396, %s397, %s398
    %p402 = pneg %p396
    %p403 = scmp.eq.s32.totalorder %s25, 1
    %p404 = por %p402, %p403
    %p405 = scmp.ne.s32.totalorder %s397, %s400
    %p406 = scmp.eq.s32.totalorder %s25, 0
    %p407 = por %p405, %p406
    %p408 = scmp.ne.s32.totalorder %s397, %s400
    %p409 = scmp.eq.s32.totalorder %s30, 1
    %p410 = por %p408, %p409
    %p411 = scmp.ne.s32.totalorder %s400, %s401
    %p412 = scmp.eq.s32.totalorder %s30, 0
    %p413 = por %p411, %p412
    %p414 = scmp.ne.s32.totalorder %s400, %s401
    %p415 = scmp.eq.s32.totalorder %s31, 1
    %p416 = por %p414, %p415
    %p418 = scmp.ne.s32.totalorder %s401, %s417
    %p419 = scmp.eq.s32.totalorder %s31, 0
    %p420 = por %p418, %p419
    %s421 = ssub.s32 %s25, %s32
    %p422 = scmp.eq.s32.totalorder %s421, 0
    %s424 = sadd.s32 %s423, 1
    %s425 = scalar_select %p422, %s423, %s424
    %p428 = pneg %p422
    %p429 = scmp.eq.s32.totalorder %s25, 1
    %p430 = por %p428, %p429
    %p431 = scmp.ne.s32.totalorder %s423, %s426
    %p432 = scmp.eq.s32.totalorder %s25, 0
    %p433 = por %p431, %p432
    %p434 = scmp.ne.s32.totalorder %s423, %s426
    %p435 = scmp.eq.s32.totalorder %s30, 1
    %p436 = por %p434, %p435
    %p437 = scmp.ne.s32.totalorder %s426, %s427
    %p438 = scmp.eq.s32.totalorder %s30, 0
    %p439 = por %p437, %p438
    %p440 = scmp.ne.s32.totalorder %s426, %s427
    %p441 = scmp.eq.s32.totalorder %s31, 1
    %p442 = por %p440, %p441
    %p444 = scmp.ne.s32.totalorder %s427, %s443
    %p445 = scmp.eq.s32.totalorder %s31, 0
    %p446 = por %p444, %p445
    %p447 = scmp.le.s32.totalorder 1, %s25
    %p448 = scmp.lt.s32.totalorder %s25, 3
    %p449 = pnand %p447, %p448
    %p450 = pneg %p449
    // Predicated region
    $region9: #{_autoencoder_forward_impl.1} parent=5 // pred_check
      _
    $region10: #{_autoencoder_forward_impl.1} parent=5 // pred_check_branch
      %452 = sbr.rel (%p449) target = $region12
    $region11: #{_autoencoder_forward_impl.1} parent=5 // pred_region
      %s453 = ssub.s32 %s25, 1
      // Predicated region
      $region13: #{_autoencoder_forward_impl.1} parent=11 // pred_check
        %p454 = pneg %p72
      $region14: #{_autoencoder_forward_impl.1} parent=11 // pred_check_branch
        %456 = sbr.rel (%p454) target = $region16
      $region15: #{_autoencoder_forward_impl.1} parent=11 // pred_region
        _
      $region16: #{_autoencoder_forward_impl.1} parent=11 // pred_fallthru
        _
      // Predicated region
      $region17: #{_autoencoder_forward_impl.1} parent=11 // pred_check
        %p457 = pneg %p93
      $region18: #{_autoencoder_forward_impl.1} parent=11 // pred_check_branch
        %459 = sbr.rel (%p457) target = $region20
      $region19: #{_autoencoder_forward_impl.1} parent=11 // pred_region
        _
      $region20: #{_autoencoder_forward_impl.1} parent=11 // pred_fallthru
        _
      // Predicated region
      $region21: #{_autoencoder_forward_impl.1} parent=11 // pred_check
        %p460 = pneg %p114
      $region22: #{_autoencoder_forward_impl.1} parent=11 // pred_check_branch
        %462 = sbr.rel (%p460) target = $region24
      $region23: #{_autoencoder_forward_impl.1} parent=11 // pred_region
        _
      $region24: #{_autoencoder_forward_impl.1} parent=11 // pred_fallthru
        _
      // Predicated region
      $region25: #{_autoencoder_forward_impl.1} parent=11 // pred_check
        %p463 = pneg %p135
      $region26: #{_autoencoder_forward_impl.1} parent=11 // pred_check_branch
        %465 = sbr.rel (%p463) target = $region28
      $region27: #{_autoencoder_forward_impl.1} parent=11 // pred_region
        _
      $region28: #{_autoencoder_forward_impl.1} parent=11 // pred_fallthru
        _
      // Predicated region
      $region29: #{_autoencoder_forward_impl.1} parent=11 // pred_check
        %p466 = pneg %p156
      $region30: #{_autoencoder_forward_impl.1} parent=11 // pred_check_branch
        %468 = sbr.rel (%p466) target = $region32
      $region31: #{_autoencoder_forward_impl.1} parent=11 // pred_region
        _
      $region32: #{_autoencoder_forward_impl.1} parent=11 // pred_fallthru
        _
      // Predicated region
      $region33: #{_autoencoder_forward_impl.1} parent=11 // pred_check
        %p469 = pneg %p177
      $region34: #{_autoencoder_forward_impl.1} parent=11 // pred_check_branch
        %471 = sbr.rel (%p469) target = $region36
      $region35: #{_autoencoder_forward_impl.1} parent=11 // pred_region
        _
      $region36: #{_autoencoder_forward_impl.1} parent=11 // pred_fallthru
        _
      // Predicated region
      $region37: #{_autoencoder_forward_impl.1} parent=11 // pred_check
        %p472 = pneg %p198
      $region38: #{_autoencoder_forward_impl.1} parent=11 // pred_check_branch
        %474 = sbr.rel (%p472) target = $region40
      $region39: #{_autoencoder_forward_impl.1} parent=11 // pred_region
        _
      $region40: #{_autoencoder_forward_impl.1} parent=11 // pred_fallthru
        _
      // Predicated region
      $region41: #{_autoencoder_forward_impl.1} parent=11 // pred_check
        %p475 = pneg %p219
      $region42: #{_autoencoder_forward_impl.1} parent=11 // pred_check_branch
        %477 = sbr.rel (%p475) target = $region44
      $region43: #{_autoencoder_forward_impl.1} parent=11 // pred_region
        _
      $region44: #{_autoencoder_forward_impl.1} parent=11 // pred_fallthru
        _
      // Predicated region
      $region45: #{_autoencoder_forward_impl.1} parent=11 // pred_check
        %p478 = pneg %p240
      $region46: #{_autoencoder_forward_impl.1} parent=11 // pred_check_branch
        %480 = sbr.rel (%p478) target = $region48
      $region47: #{_autoencoder_forward_impl.1} parent=11 // pred_region
        _
      $region48: #{_autoencoder_forward_impl.1} parent=11 // pred_fallthru
        _
      // Predicated region
      $region49: #{_autoencoder_forward_impl.1} parent=11 // pred_check
        %p481 = pneg %p261
      $region50: #{_autoencoder_forward_impl.1} parent=11 // pred_check_branch
        %483 = sbr.rel (%p481) target = $region52
      $region51: #{_autoencoder_forward_impl.1} parent=11 // pred_region
        _
      $region52: #{_autoencoder_forward_impl.1} parent=11 // pred_fallthru
        _
      // Predicated region
      $region53: #{_autoencoder_forward_impl.1} parent=11 // pred_check
        %p484 = pneg %p282
      $region54: #{_autoencoder_forward_impl.1} parent=11 // pred_check_branch
        %486 = sbr.rel (%p484) target = $region56
      $region55: #{_autoencoder_forward_impl.1} parent=11 // pred_region
        _
      $region56: #{_autoencoder_forward_impl.1} parent=11 // pred_fallthru
        _
      // Predicated region
      $region57: #{_autoencoder_forward_impl.1} parent=11 // pred_check
        %p487 = pneg %p303
      $region58: #{_autoencoder_forward_impl.1} parent=11 // pred_check_branch
        %489 = sbr.rel (%p487) target = $region60
      $region59: #{_autoencoder_forward_impl.1} parent=11 // pred_region
        _
      $region60: #{_autoencoder_forward_impl.1} parent=11 // pred_fallthru
        _
      // Predicated region
      $region61: #{_autoencoder_forward_impl.1} parent=11 // pred_check
        %p490 = pneg %p324
      $region62: #{_autoencoder_forward_impl.1} parent=11 // pred_check_branch
        %492 = sbr.rel (%p490) target = $region64
      $region63: #{_autoencoder_forward_impl.1} parent=11 // pred_region
        _
      $region64: #{_autoencoder_forward_impl.1} parent=11 // pred_fallthru
        _
      // Predicated region
      $region65: #{_autoencoder_forward_impl.1} parent=11 // pred_check
        %p493 = pneg %p345
      $region66: #{_autoencoder_forward_impl.1} parent=11 // pred_check_branch
        %495 = sbr.rel (%p493) target = $region68
      $region67: #{_autoencoder_forward_impl.1} parent=11 // pred_region
        _
      $region68: #{_autoencoder_forward_impl.1} parent=11 // pred_fallthru
        _
      // Predicated region
      $region69: #{_autoencoder_forward_impl.1} parent=11 // pred_check
        %p496 = pneg %p366
      $region70: #{_autoencoder_forward_impl.1} parent=11 // pred_check_branch
        %498 = sbr.rel (%p496) target = $region72
      $region71: #{_autoencoder_forward_impl.1} parent=11 // pred_region
        _
      $region72: #{_autoencoder_forward_impl.1} parent=11 // pred_fallthru
        _
      // Predicated region
      $region73: #{_autoencoder_forward_impl.1} parent=11 // pred_check
        %p499 = pneg %p387
      $region74: #{_autoencoder_forward_impl.1} parent=11 // pred_check_branch
        %501 = sbr.rel (%p499) target = $region76
      $region75: #{_autoencoder_forward_impl.1} parent=11 // pred_region
        _
      $region76: #{_autoencoder_forward_impl.1} parent=11 // pred_fallthru
        _
    $region12: #{_autoencoder_forward_impl.1} parent=5 // pred_fallthru
      _
    %p502 = scmp.lt.s32.totalorder %s25, 2
    // Predicated region
    $region77: #{_autoencoder_forward_impl.1} parent=5 // pred_check
      %p503 = pneg %p502
    $region78: #{_autoencoder_forward_impl.1} parent=5 // pred_check_branch
      %505 = sbr.rel (%p503) target = $region80
    $region79: #{_autoencoder_forward_impl.1} parent=5 // pred_region
      // Predicated region
      $region81: #{_autoencoder_forward_impl.1} parent=79 // pred_check
        %p506 = pneg %p45
      $region82: #{_autoencoder_forward_impl.1} parent=79 // pred_check_branch
        %508 = sbr.rel (%p506) target = $region84
      $region83: #{_autoencoder_forward_impl.1} parent=79 // pred_region
        %s509 = smul.u32 16, %s25
        %p510 = scmp.lt.s32.totalorder %s509, 31
        %s511 = scalar_select %p510, %s509, 31
        %s512 = smul.addr %s511, 4
        %s513 = scalar_lea.vmem %s0, %s512
        %s514 = smul.u32 16, %s25
      $region84: #{_autoencoder_forward_impl.1} parent=79 // pred_fallthru
        _
    $region80: #{_autoencoder_forward_impl.1} parent=5 // pred_fallthru
      _
    %p515 = scmp.le.s32.totalorder 1, %s25
    %p516 = scmp.lt.s32.totalorder %s25, 3
    %p517 = pnand %p515, %p516
    %p518 = pneg %p517
    // Predicated region
    $region85: #{_autoencoder_forward_impl.1} parent=5 // pred_check
      _
    $region86: #{_autoencoder_forward_impl.1} parent=5 // pred_check_branch
      %520 = sbr.rel (%p517) target = $region88
    $region87: #{_autoencoder_forward_impl.1} parent=5 // pred_region
      %s521 = ssub.s32 %s25, 1
      %s522 = smul.u32 16, %s30
      %p523 = scmp.lt.s32.totalorder %s522, 31
      %s524 = scalar_select %p523, %s522, 31
      %s525 = smul.addr %s524, 4
      %s526 = scalar_lea.vmem %s0, %s525
      %p527 = pneg %p51
      %p528 = pneg %p48
      %p529 = pneg %p72
      %p530 = pneg %p69
      %p531 = pneg %p93
      %p532 = pneg %p90
      %p533 = pneg %p114
      %p534 = pneg %p111
      %p535 = pneg %p135
      %p536 = pneg %p132
      %p537 = pneg %p156
      %p538 = pneg %p153
      %p539 = pneg %p177
      %p540 = pneg %p174
      %p541 = pneg %p198
      %p542 = pneg %p195
      %p543 = pneg %p219
      %p544 = pneg %p216
      %p545 = pneg %p240
      %p546 = pneg %p237
      %p547 = pneg %p261
      %p548 = pneg %p258
      %p549 = pneg %p282
      %p550 = pneg %p279
      %p551 = pneg %p303
      %p552 = pneg %p300
      %p553 = pneg %p324
      %p554 = pneg %p321
      %p555 = pneg %p345
      %p556 = pneg %p342
      %p557 = pneg %p366
      %p558 = pneg %p363
      %p559 = pneg %p387
      %p560 = pneg %p384
      %p561 = pneg %p413
      %p562 = pneg %p410
      %s563 = smul.u32 16, %s30
      %p564 = scmp.lt.s32.totalorder %s563, 31
      %s565 = scalar_select %p564, %s563, 31
      %s566 = smul.addr %s565, 8
      %s567 = scalar_lea.vmem %s17, %s566
      %p568 = pneg %p439
      %p569 = pneg %p436
      %s570 = smul.u32 16, %s30
      %p571 = scmp.lt.s32.totalorder %s570, 31
      %s572 = scalar_select %p571, %s570, 31
      %s573 = smul.addr %s572, 8
      %s574 = scalar_lea.vmem %s18, %s573
      %s575 = smul.u32 16, %s30
      %p576 = scmp.lt.s32.totalorder %s575, 31
      %s577 = scalar_select %p576, %s575, 31
      %s578 = smul.addr %s577, 4
      %s579 = scalar_lea.vmem %s0, %s578
      %s580 = smul.u32 16, %s30
      %s581 = smul.u32 16, %s30
      %p582 = scmp.lt.s32.totalorder %s581, 31
      %s583 = scalar_select %p582, %s581, 31
      %s584 = smul.addr %s583, 8
      %s585 = scalar_lea.vmem %s17, %s584
      %s586 = smul.u32 16, %s30
      %s587 = smul.u32 16, %s30
      %p588 = scmp.lt.s32.totalorder %s587, 31
      %s589 = scalar_select %p588, %s587, 31
      %s590 = smul.addr %s589, 8
      %s591 = scalar_lea.vmem %s18, %s590
      %s592 = smul.u32 16, %s30
      %v594 = vld [vmem:[%s579] sm:$0xf]
      %v595 = vld [vmem:[%s579 + $0x4] sm:$0xf]
      %v596 = vld [vmem:[%s579 + $0x8] sm:$0xf]
      %v597 = vld [vmem:[%s579 + $0xc] sm:$0xf]
      %v598 = vld [vmem:[%s579 + $0x10] sm:$0xf]
      %v599 = vld [vmem:[%s579 + $0x14] sm:$0xf]
      %v600 = vld [vmem:[%s579 + $0x18] sm:$0xf]
      %v601 = vld [vmem:[%s579 + $0x1c] sm:$0xf]
      %v602 = vld [vmem:[%s579 + $0x20] sm:$0xf]
      %v603 = vld [vmem:[%s579 + $0x24] sm:$0xf]
      %v604 = vld [vmem:[%s579 + $0x28] sm:$0xf]
      %v605 = vld [vmem:[%s579 + $0x2c] sm:$0xf]
      %v606 = vld [vmem:[%s579 + $0x30] sm:$0xf]
      %v607 = vld [vmem:[%s579 + $0x34] sm:$0xf]
      %v608 = vld [vmem:[%s579 + $0x38] sm:$0xf]
      %v609 = vld [vmem:[%s579 + $0x3c] sm:$0xf]
      %v610 = vld [vmem:[%s1] sm:$0xf]
      %v611 = vld [vmem:[%s1 + $0x4] sm:$0xf]
      %v612 = vld [vmem:[%s1 + $0x8] sm:$0xf]
      %v613 = vld [vmem:[%s1 + $0xc] sm:$0xf]
      %v614 = vld [vmem:[%s1 + $0x10] sm:$0xf]
      %v615 = vld [vmem:[%s1 + $0x14] sm:$0xf]
      %v616 = vld [vmem:[%s1 + $0x18] sm:$0xf]
      %v617 = vld [vmem:[%s1 + $0x1c] sm:$0xf]
      %v618 = vld [vmem:[%s1 + $0x20] sm:$0xf]
      %v619 = vld [vmem:[%s1 + $0x24] sm:$0xf]
      %v620 = vld [vmem:[%s1 + $0x28] sm:$0xf]
      %v621 = vld [vmem:[%s1 + $0x2c] sm:$0xf]
      %v622 = vld [vmem:[%s1 + $0x30] sm:$0xf]
      %v623 = vld [vmem:[%s1 + $0x34] sm:$0xf]
      %v624 = vld [vmem:[%s1 + $0x38] sm:$0xf]
      %v625 = vld [vmem:[%s1 + $0x3c] sm:$0xf]
      %v626 = vld [vmem:[%s2] sm:$0x1]
      %v628 = vlaneseq
      %v629 = vshrl.u32 %v628, 7
      %v630 = vsub.s32 0, %v629
      %v631 = vrot.slane %v626, %v630
      %v649 = vunpack.c.l.b16 %v594
      %v650 = vunpack.c.l.b16 %v595
      %v651 = vunpack.c.l.b16 %v596
      %v652 = vunpack.c.l.b16 %v597
      %v653 = vunpack.c.l.b16 %v598
      %v654 = vunpack.c.l.b16 %v599
      %v655 = vunpack.c.l.b16 %v600
      %v656 = vunpack.c.l.b16 %v601
      %v657 = vunpack.c.l.b16 %v602
      %v658 = vunpack.c.l.b16 %v603
      %v659 = vunpack.c.l.b16 %v604
      %v660 = vunpack.c.l.b16 %v605
      %v661 = vunpack.c.l.b16 %v606
      %v662 = vunpack.c.l.b16 %v607
      %v663 = vunpack.c.l.b16 %v608
      %v664 = vunpack.c.l.b16 %v609
      %v665 = vpack.c.b16 %v650, %v649
      %v666 = vpack.c.b16 %v652, %v651
      %v667 = vpack.c.b16 %v654, %v653
      %v668 = vpack.c.b16 %v656, %v655
      %v669 = vpack.c.b16 %v658, %v657
      %v670 = vpack.c.b16 %v660, %v659
      %v671 = vpack.c.b16 %v662, %v661
      %v672 = vpack.c.b16 %v664, %v663
      %v697 = vunpack.c.l.b16 %v610
      %v698 = vunpack.c.l.b16 %v611
      %v699 = vunpack.c.l.b16 %v612
      %v700 = vunpack.c.l.b16 %v613
      %v701 = vunpack.c.l.b16 %v614
      %v702 = vunpack.c.l.b16 %v615
      %v703 = vunpack.c.l.b16 %v616
      %v704 = vunpack.c.l.b16 %v617
      %v705 = vunpack.c.l.b16 %v618
      %v706 = vunpack.c.l.b16 %v619
      %v707 = vunpack.c.l.b16 %v620
      %v708 = vunpack.c.l.b16 %v621
      %v709 = vunpack.c.l.b16 %v622
      %v710 = vunpack.c.l.b16 %v623
      %v711 = vunpack.c.l.b16 %v624
      %v712 = vunpack.c.l.b16 %v625
      %v713 = vpack.c.b16 %v698, %v697
      %v714 = vpack.c.b16 %v700, %v699
      %v715 = vpack.c.b16 %v702, %v701
      %v716 = vpack.c.b16 %v704, %v703
      %v717 = vpack.c.b16 %v706, %v705
      %v718 = vpack.c.b16 %v708, %v707
      %v719 = vpack.c.b16 %v710, %v709
      %v720 = vpack.c.b16 %v712, %v711
      %729 = vmatprep.subr.bf16.mxu0 0
      %730 = vmatpush1.bf16.msra.mxu0 %v713
      %731 = vmatprep.subr.bf16.mxu0 0
      %732 = vmatpush1.bf16.msra.mxu0 %v714
      %733 = vmatprep.subr.bf16.mxu0 0
      %734 = vmatpush1.bf16.msra.mxu0 %v715
      %735 = vmatprep.subr.bf16.mxu0 0
      %736 = vmatpush1.bf16.msra.mxu0 %v716
      %737 = vmatprep.subr.bf16.mxu0 0
      %738 = vmatpush1.bf16.msra.mxu0 %v717
      %739 = vmatprep.subr.bf16.mxu0 0
      %740 = vmatpush1.bf16.msra.mxu0 %v718
      %741 = vmatprep.subr.bf16.mxu0 0
      %742 = vmatpush1.bf16.msra.mxu0 %v719
      %743 = vmatprep.subr.bf16.mxu0 0
      %744 = vmatpush1.bf16.msra.mxu0 %v720
      %745 = vmatprep.subr.bf16.mxu0 0
      %746 = vmatpush1.bf16.msra.mxu0 0
      %747 = vmatprep.subr.bf16.mxu0 0
      %748 = vmatpush1.bf16.msra.mxu0 0
      %749 = vmatprep.subr.bf16.mxu0 0
      %750 = vmatpush1.bf16.msra.mxu0 0
      %751 = vmatprep.subr.bf16.mxu0 0
      %752 = vmatpush1.bf16.msra.mxu0 0
      %753 = vmatprep.subr.bf16.mxu0 0
      %754 = vmatpush1.bf16.msra.mxu0 0
      %755 = vmatprep.subr.bf16.mxu0 0
      %756 = vmatpush1.bf16.msra.mxu0 0
      %757 = vmatprep.subr.bf16.mxu0 0
      %758 = vmatpush1.bf16.msra.mxu0 0
      %759 = vmatprep.subr.bf16.mxu0 0
      %760 = vmatpush1.bf16.msra.mxu0 0
      %761 = vmatprep.mubr.bf16.mxu0 0
      %762 = vmatmul.mubr.bf16.gmra.mrb[0].mxu0 %v665
      %v763 = vpop.f32.mrb[0].mxu0
      %v764 = vadd.f32 %v631, %v763
      %v765 = vpop.f32.mrb[0].mxu0
      %v766 = vpop.f32.mrb[0].mxu0
      %v767 = vadd.f32 %v631, %v766
      %v768 = vpop.f32.mrb[0].mxu0
      %769 = vmatprep.mubr.bf16.mxu0 0
      %770 = vmatmul.mubr.bf16.gmra.mrb[0].mxu0 %v666
      %v771 = vpop.f32.mrb[0].mxu0
      %v772 = vadd.f32 %v631, %v771
      %v773 = vpop.f32.mrb[0].mxu0
      %v774 = vpop.f32.mrb[0].mxu0
      %v775 = vadd.f32 %v631, %v774
      %v776 = vpop.f32.mrb[0].mxu0
      %777 = vmatprep.mubr.bf16.mxu0 0
      %778 = vmatmul.mubr.bf16.gmra.mrb[0].mxu0 %v667
      %v779 = vpop.f32.mrb[0].mxu0
      %v780 = vadd.f32 %v631, %v779
      %v781 = vpop.f32.mrb[0].mxu0
      %v782 = vpop.f32.mrb[0].mxu0
      %v783 = vadd.f32 %v631, %v782
      %v784 = vpop.f32.mrb[0].mxu0
      %785 = vmatprep.mubr.bf16.mxu0 0
      %786 = vmatmul.mubr.bf16.gmra.mrb[0].mxu0 %v668
      %v787 = vpop.f32.mrb[0].mxu0
      %v788 = vadd.f32 %v631, %v787
      %v789 = vpop.f32.mrb[0].mxu0
      %v790 = vpop.f32.mrb[0].mxu0
      %v791 = vadd.f32 %v631, %v790
      %v792 = vpop.f32.mrb[0].mxu0
      %793 = vmatprep.mubr.bf16.mxu0 0
      %794 = vmatmul.mubr.bf16.gmra.mrb[0].mxu0 %v669
      %v795 = vpop.f32.mrb[0].mxu0
      %v796 = vadd.f32 %v631, %v795
      %v797 = vpop.f32.mrb[0].mxu0
      %v798 = vpop.f32.mrb[0].mxu0
      %v799 = vadd.f32 %v631, %v798
      %v800 = vpop.f32.mrb[0].mxu0
      %801 = vmatprep.mubr.bf16.mxu0 0
      %802 = vmatmul.mubr.bf16.gmra.mrb[0].mxu0 %v670
      %v803 = vpop.f32.mrb[0].mxu0
      %v804 = vadd.f32 %v631, %v803
      %v805 = vpop.f32.mrb[0].mxu0
      %v806 = vpop.f32.mrb[0].mxu0
      %v807 = vadd.f32 %v631, %v806
      %v808 = vpop.f32.mrb[0].mxu0
      %809 = vmatprep.mubr.bf16.mxu0 0
      %810 = vmatmul.mubr.bf16.gmra.mrb[0].mxu0 %v671
      %v811 = vpop.f32.mrb[0].mxu0
      %v812 = vadd.f32 %v631, %v811
      %v813 = vpop.f32.mrb[0].mxu0
      %v814 = vpop.f32.mrb[0].mxu0
      %v815 = vadd.f32 %v631, %v814
      %v816 = vpop.f32.mrb[0].mxu0
      %817 = vmatprep.mubr.bf16.mxu0 0
      %818 = vmatmul.mubr.bf16.gmra.mrb[0].mxu0 %v672
      %v819 = vpop.f32.mrb[0].mxu0
      %v820 = vadd.f32 %v631, %v819
      %v821 = vpop.f32.mrb[0].mxu0
      %v822 = vpop.f32.mrb[0].mxu0
      %v823 = vadd.f32 %v631, %v822
      %v824 = vpop.f32.mrb[0].mxu0
      %825 = vdwg.mxu0
      %v826 = vmax.f32 %v764, 0.0
      %v827 = vmax.f32 %v767, 0.0
      %v828 = vmax.f32 %v772, 0.0
      %v829 = vmax.f32 %v775, 0.0
      %v830 = vmax.f32 %v780, 0.0
      %v831 = vmax.f32 %v783, 0.0
      %v832 = vmax.f32 %v788, 0.0
      %v833 = vmax.f32 %v791, 0.0
      %v834 = vmax.f32 %v796, 0.0
      %v835 = vmax.f32 %v799, 0.0
      %v836 = vmax.f32 %v804, 0.0
      %v837 = vmax.f32 %v807, 0.0
      %v838 = vmax.f32 %v812, 0.0
      %v839 = vmax.f32 %v815, 0.0
      %v840 = vmax.f32 %v820, 0.0
      %v841 = vmax.f32 %v823, 0.0
      %v842 = vpack.c.bf16 %v827, %v826
      %v843 = vpack.c.bf16 %v829, %v828
      %v844 = vpack.c.bf16 %v831, %v830
      %v845 = vpack.c.bf16 %v833, %v832
      %v846 = vpack.c.bf16 %v835, %v834
      %v847 = vpack.c.bf16 %v837, %v836
      %v848 = vpack.c.bf16 %v839, %v838
      %v849 = vpack.c.bf16 %v841, %v840
      %v850 = vld [vmem:[%s3] sm:$0xf]
      %v851 = vld [vmem:[%s3 + $0x4] sm:$0xf]
      %v852 = vld [vmem:[%s3 + $0x8] sm:$0xf]
      %v853 = vld [vmem:[%s3 + $0xc] sm:$0xf]
      %v854 = vld [vmem:[%s3 + $0x10] sm:$0xf]
      %v855 = vld [vmem:[%s3 + $0x14] sm:$0xf]
      %v856 = vld [vmem:[%s3 + $0x18] sm:$0xf]
      %v857 = vld [vmem:[%s3 + $0x1c] sm:$0xf]
      %v858 = vld [vmem:[%s3 + $0x20] sm:$0xf]
      %v859 = vld [vmem:[%s3 + $0x24] sm:$0xf]
      %v860 = vld [vmem:[%s3 + $0x28] sm:$0xf]
      %v861 = vld [vmem:[%s3 + $0x2c] sm:$0xf]
      %v862 = vld [vmem:[%s3 + $0x30] sm:$0xf]
      %v863 = vld [vmem:[%s3 + $0x34] sm:$0xf]
      %v864 = vld [vmem:[%s3 + $0x38] sm:$0xf]
      %v865 = vld [vmem:[%s3 + $0x3c] sm:$0xf]
      %v866 = vld [vmem:[%s4] sm:$0x1]
      %v868 = vlaneseq
      %v869 = vshrl.u32 %v868, 7
      %v870 = vsub.s32 0, %v869
      %v871 = vrot.slane %v866, %v870
      %v889 = vunpack.c.l.b16 %v850
      %v890 = vunpack.c.l.b16 %v851
      %v891 = vunpack.c.l.b16 %v852
      %v892 = vunpack.c.l.b16 %v853
      %v893 = vunpack.c.l.b16 %v854
      %v894 = vunpack.c.l.b16 %v855
      %v895 = vunpack.c.l.b16 %v856
      %v896 = vunpack.c.l.b16 %v857
      %v897 = vunpack.c.l.b16 %v858
      %v898 = vunpack.c.l.b16 %v859
      %v899 = vunpack.c.l.b16 %v860
      %v900 = vunpack.c.l.b16 %v861
      %v901 = vunpack.c.l.b16 %v862
      %v902 = vunpack.c.l.b16 %v863
      %v903 = vunpack.c.l.b16 %v864
      %v904 = vunpack.c.l.b16 %v865
      %v905 = vpack.c.b16 %v890, %v889
      %v906 = vpack.c.b16 %v892, %v891
      %v907 = vpack.c.b16 %v894, %v893
      %v908 = vpack.c.b16 %v896, %v895
      %v909 = vpack.c.b16 %v898, %v897
      %v910 = vpack.c.b16 %v900, %v899
      %v911 = vpack.c.b16 %v902, %v901
      %v912 = vpack.c.b16 %v904, %v903
      %921 = vmatprep.subr.bf16.mxu0 0
      %922 = vmatpush1.bf16.msra.mxu0 %v905
      %923 = vmatprep.subr.bf16.mxu0 0
      %924 = vmatpush1.bf16.msra.mxu0 %v906
      %925 = vmatprep.subr.bf16.mxu0 0
      %926 = vmatpush1.bf16.msra.mxu0 %v907
      %927 = vmatprep.subr.bf16.mxu0 0
      %928 = vmatpush1.bf16.msra.mxu0 %v908
      %929 = vmatprep.subr.bf16.mxu0 0
      %930 = vmatpush1.bf16.msra.mxu0 %v909
      %931 = vmatprep.subr.bf16.mxu0 0
      %932 = vmatpush1.bf16.msra.mxu0 %v910
      %933 = vmatprep.subr.bf16.mxu0 0
      %934 = vmatpush1.bf16.msra.mxu0 %v911
      %935 = vmatprep.subr.bf16.mxu0 0
      %936 = vmatpush1.bf16.msra.mxu0 %v912
      %937 = vmatprep.subr.bf16.mxu0 0
      %938 = vmatpush1.bf16.msra.mxu0 0
      %939 = vmatprep.subr.bf16.mxu0 0
      %940 = vmatpush1.bf16.msra.mxu0 0
      %941 = vmatprep.subr.bf16.mxu0 0
      %942 = vmatpush1.bf16.msra.mxu0 0
      %943 = vmatprep.subr.bf16.mxu0 0
      %944 = vmatpush1.bf16.msra.mxu0 0
      %945 = vmatprep.subr.bf16.mxu0 0
      %946 = vmatpush1.bf16.msra.mxu0 0
      %947 = vmatprep.subr.bf16.mxu0 0
      %948 = vmatpush1.bf16.msra.mxu0 0
      %949 = vmatprep.subr.bf16.mxu0 0
      %950 = vmatpush1.bf16.msra.mxu0 0
      %951 = vmatprep.subr.bf16.mxu0 0
      %952 = vmatpush1.bf16.msra.mxu0 0
      %953 = vmatprep.mubr.bf16.mxu0 0
      %954 = vmatmul.mubr.bf16.gmra.mrb[0].mxu0 %v842
      %v955 = vpop.f32.mrb[0].mxu0
      %v956 = vadd.f32 %v871, %v955
      %v957 = vpop.f32.mrb[0].mxu0
      %v958 = vpop.f32.mrb[0].mxu0
      %v959 = vadd.f32 %v871, %v958
      %v960 = vpop.f32.mrb[0].mxu0
      %961 = vmatprep.mubr.bf16.mxu0 0
      %962 = vmatmul.mubr.bf16.gmra.mrb[0].mxu0 %v843
      %v963 = vpop.f32.mrb[0].mxu0
      %v964 = vadd.f32 %v871, %v963
      %v965 = vpop.f32.mrb[0].mxu0
      %v966 = vpop.f32.mrb[0].mxu0
      %v967 = vadd.f32 %v871, %v966
      %v968 = vpop.f32.mrb[0].mxu0
      %969 = vmatprep.mubr.bf16.mxu0 0
      %970 = vmatmul.mubr.bf16.gmra.mrb[0].mxu0 %v844
      %v971 = vpop.f32.mrb[0].mxu0
      %v972 = vadd.f32 %v871, %v971
      %v973 = vpop.f32.mrb[0].mxu0
      %v974 = vpop.f32.mrb[0].mxu0
      %v975 = vadd.f32 %v871, %v974
      %v976 = vpop.f32.mrb[0].mxu0
      %977 = vmatprep.mubr.bf16.mxu0 0
      %978 = vmatmul.mubr.bf16.gmra.mrb[0].mxu0 %v845
      %v979 = vpop.f32.mrb[0].mxu0
      %v980 = vadd.f32 %v871, %v979
      %v981 = vpop.f32.mrb[0].mxu0
      %v982 = vpop.f32.mrb[0].mxu0
      %v983 = vadd.f32 %v871, %v982
      %v984 = vpop.f32.mrb[0].mxu0
      %985 = vmatprep.mubr.bf16.mxu0 0
      %986 = vmatmul.mubr.bf16.gmra.mrb[0].mxu0 %v846
      %v987 = vpop.f32.mrb[0].mxu0
      %v988 = vadd.f32 %v871, %v987
      %v989 = vpop.f32.mrb[0].mxu0
      %v990 = vpop.f32.mrb[0].mxu0
      %v991 = vadd.f32 %v871, %v990
      %v992 = vpop.f32.mrb[0].mxu0
      %993 = vmatprep.mubr.bf16.mxu0 0
      %994 = vmatmul.mubr.bf16.gmra.mrb[0].mxu0 %v847
      %v995 = vpop.f32.mrb[0].mxu0
      %v996 = vadd.f32 %v871, %v995
      %v997 = vpop.f32.mrb[0].mxu0
      %v998 = vpop.f32.mrb[0].mxu0
      %v999 = vadd.f32 %v871, %v998
      %v1000 = vpop.f32.mrb[0].mxu0
      %1001 = vmatprep.mubr.bf16.mxu0 0
      %1002 = vmatmul.mubr.bf16.gmra.mrb[0].mxu0 %v848
      %v1003 = vpop.f32.mrb[0].mxu0
      %v1004 = vadd.f32 %v871, %v1003
      %v1005 = vpop.f32.mrb[0].mxu0
      %v1006 = vpop.f32.mrb[0].mxu0
      %v1007 = vadd.f32 %v871, %v1006
      %v1008 = vpop.f32.mrb[0].mxu0
      %1009 = vmatprep.mubr.bf16.mxu0 0
      %1010 = vmatmul.mubr.bf16.gmra.mrb[0].mxu0 %v849
      %v1011 = vpop.f32.mrb[0].mxu0
      %v1012 = vadd.f32 %v871, %v1011
      %v1013 = vpop.f32.mrb[0].mxu0
      %v1014 = vpop.f32.mrb[0].mxu0
      %v1015 = vadd.f32 %v871, %v1014
      %v1016 = vpop.f32.mrb[0].mxu0
      %1017 = vdwg.mxu0
      %v1018 = vmax.f32 %v956, 0.0
      %v1019 = vmax.f32 %v959, 0.0
      %v1020 = vmax.f32 %v964, 0.0
      %v1021 = vmax.f32 %v967, 0.0
      %v1022 = vmax.f32 %v972, 0.0
      %v1023 = vmax.f32 %v975, 0.0
      %v1024 = vmax.f32 %v980, 0.0
      %v1025 = vmax.f32 %v983, 0.0
      %v1026 = vmax.f32 %v988, 0.0
      %v1027 = vmax.f32 %v991, 0.0
      %v1028 = vmax.f32 %v996, 0.0
      %v1029 = vmax.f32 %v999, 0.0
      %v1030 = vmax.f32 %v1004, 0.0
      %v1031 = vmax.f32 %v1007, 0.0
      %v1032 = vmax.f32 %v1012, 0.0
      %v1033 = vmax.f32 %v1015, 0.0
      %v1034 = vpack.c.bf16 %v1019, %v1018
      %v1035 = vpack.c.bf16 %v1021, %v1020
      %v1036 = vpack.c.bf16 %v1023, %v1022
      %v1037 = vpack.c.bf16 %v1025, %v1024
      %v1038 = vpack.c.bf16 %v1027, %v1026
      %v1039 = vpack.c.bf16 %v1029, %v1028
      %v1040 = vpack.c.bf16 %v1031, %v1030
      %v1041 = vpack.c.bf16 %v1033, %v1032
      %v1042 = vld [vmem:[%s5] sm:$0xf]
      %v1043 = vld [vmem:[%s5 + $0x4] sm:$0xf]
      %v1044 = vld [vmem:[%s5 + $0x8] sm:$0xf]
      %v1045 = vld [vmem:[%s5 + $0xc] sm:$0xf]
      %v1046 = vld [vmem:[%s5 + $0x10] sm:$0xf]
      %v1047 = vld [vmem:[%s5 + $0x14] sm:$0xf]
      %v1048 = vld [vmem:[%s5 + $0x18] sm:$0xf]
      %v1049 = vld [vmem:[%s5 + $0x1c] sm:$0xf]
      %v1050 = vld [vmem:[%s5 + $0x20] sm:$0xf]
      %v1051 = vld [vmem:[%s5 + $0x24] sm:$0xf]
      %v1052 = vld [vmem:[%s5 + $0x28] sm:$0xf]
      %v1053 = vld [vmem:[%s5 + $0x2c] sm:$0xf]
      %v1054 = vld [vmem:[%s5 + $0x30] sm:$0xf]
      %v1055 = vld [vmem:[%s5 + $0x34] sm:$0xf]
      %v1056 = vld [vmem:[%s5 + $0x38] sm:$0xf]
      %v1057 = vld [vmem:[%s5 + $0x3c] sm:$0xf]
      %v1058 = vld [vmem:[%s6] sm:$0x1]
      %v1060 = vlaneseq
      %v1061 = vshrl.u32 %v1060, 7
      %v1062 = vsub.s32 0, %v1061
      %v1063 = vrot.slane %v1058, %v1062
      %v1081 = vunpack.c.l.b16 %v1042
      %v1082 = vunpack.c.l.b16 %v1043
      %v1083 = vunpack.c.l.b16 %v1044
      %v1084 = vunpack.c.l.b16 %v1045
      %v1085 = vunpack.c.l.b16 %v1046
      %v1086 = vunpack.c.l.b16 %v1047
      %v1087 = vunpack.c.l.b16 %v1048
      %v1088 = vunpack.c.l.b16 %v1049
      %v1089 = vunpack.c.l.b16 %v1050
      %v1090 = vunpack.c.l.b16 %v1051
      %v1091 = vunpack.c.l.b16 %v1052
      %v1092 = vunpack.c.l.b16 %v1053
      %v1093 = vunpack.c.l.b16 %v1054
      %v1094 = vunpack.c.l.b16 %v1055
      %v1095 = vunpack.c.l.b16 %v1056
      %v1096 = vunpack.c.l.b16 %v1057
      %v1097 = vpack.c.b16 %v1082, %v1081
      %v1098 = vpack.c.b16 %v1084, %v1083
      %v1099 = vpack.c.b16 %v1086, %v1085
      %v1100 = vpack.c.b16 %v1088, %v1087
      %v1101 = vpack.c.b16 %v1090, %v1089
      %v1102 = vpack.c.b16 %v1092, %v1091
      %v1103 = vpack.c.b16 %v1094, %v1093
      %v1104 = vpack.c.b16 %v1096, %v1095
      %1113 = vmatprep.subr.bf16.mxu0 0
      %1114 = vmatpush1.bf16.msra.mxu0 %v1097
      %1115 = vmatprep.subr.bf16.mxu0 0
      %1116 = vmatpush1.bf16.msra.mxu0 %v1098
      %1117 = vmatprep.subr.bf16.mxu0 0
      %1118 = vmatpush1.bf16.msra.mxu0 %v1099
      %1119 = vmatprep.subr.bf16.mxu0 0
      %1120 = vmatpush1.bf16.msra.mxu0 %v1100
      %1121 = vmatprep.subr.bf16.mxu0 0
      %1122 = vmatpush1.bf16.msra.mxu0 %v1101
      %1123 = vmatprep.subr.bf16.mxu0 0
      %1124 = vmatpush1.bf16.msra.mxu0 %v1102
      %1125 = vmatprep.subr.bf16.mxu0 0
      %1126 = vmatpush1.bf16.msra.mxu0 %v1103
      %1127 = vmatprep.subr.bf16.mxu0 0
      %1128 = vmatpush1.bf16.msra.mxu0 %v1104
      %1129 = vmatprep.subr.bf16.mxu0 0
      %1130 = vmatpush1.bf16.msra.mxu0 0
      %1131 = vmatprep.subr.bf16.mxu0 0
      %1132 = vmatpush1.bf16.msra.mxu0 0
      %1133 = vmatprep.subr.bf16.mxu0 0
      %1134 = vmatpush1.bf16.msra.mxu0 0
      %1135 = vmatprep.subr.bf16.mxu0 0
      %1136 = vmatpush1.bf16.msra.mxu0 0
      %1137 = vmatprep.subr.bf16.mxu0 0
      %1138 = vmatpush1.bf16.msra.mxu0 0
      %1139 = vmatprep.subr.bf16.mxu0 0
      %1140 = vmatpush1.bf16.msra.mxu0 0
      %1141 = vmatprep.subr.bf16.mxu0 0
      %1142 = vmatpush1.bf16.msra.mxu0 0
      %1143 = vmatprep.subr.bf16.mxu0 0
      %1144 = vmatpush1.bf16.msra.mxu0 0
      %1145 = vmatprep.mubr.bf16.mxu0 0
      %1146 = vmatmul.mubr.bf16.gmra.mrb[0].mxu0 %v1034
      %v1147 = vpop.f32.mrb[0].mxu0
      %v1148 = vadd.f32 %v1063, %v1147
      %v1149 = vpop.f32.mrb[0].mxu0
      %v1150 = vpop.f32.mrb[0].mxu0
      %v1151 = vadd.f32 %v1063, %v1150
      %v1152 = vpop.f32.mrb[0].mxu0
      %1153 = vmatprep.mubr.bf16.mxu0 0
      %1154 = vmatmul.mubr.bf16.gmra.mrb[0].mxu0 %v1035
      %v1155 = vpop.f32.mrb[0].mxu0
      %v1156 = vadd.f32 %v1063, %v1155
      %v1157 = vpop.f32.mrb[0].mxu0
      %v1158 = vpop.f32.mrb[0].mxu0
      %v1159 = vadd.f32 %v1063, %v1158
      %v1160 = vpop.f32.mrb[0].mxu0
      %1161 = vmatprep.mubr.bf16.mxu0 0
      %1162 = vmatmul.mubr.bf16.gmra.mrb[0].mxu0 %v1036
      %v1163 = vpop.f32.mrb[0].mxu0
      %v1164 = vadd.f32 %v1063, %v1163
      %v1165 = vpop.f32.mrb[0].mxu0
      %v1166 = vpop.f32.mrb[0].mxu0
      %v1167 = vadd.f32 %v1063, %v1166
      %v1168 = vpop.f32.mrb[0].mxu0
      %1169 = vmatprep.mubr.bf16.mxu0 0
      %1170 = vmatmul.mubr.bf16.gmra.mrb[0].mxu0 %v1037
      %v1171 = vpop.f32.mrb[0].mxu0
      %v1172 = vadd.f32 %v1063, %v1171
      %v1173 = vpop.f32.mrb[0].mxu0
      %v1174 = vpop.f32.mrb[0].mxu0
      %v1175 = vadd.f32 %v1063, %v1174
      %v1176 = vpop.f32.mrb[0].mxu0
      %1177 = vmatprep.mubr.bf16.mxu0 0
      %1178 = vmatmul.mubr.bf16.gmra.mrb[0].mxu0 %v1038
      %v1179 = vpop.f32.mrb[0].mxu0
      %v1180 = vadd.f32 %v1063, %v1179
      %v1181 = vpop.f32.mrb[0].mxu0
      %v1182 = vpop.f32.mrb[0].mxu0
      %v1183 = vadd.f32 %v1063, %v1182
      %v1184 = vpop.f32.mrb[0].mxu0
      %1185 = vmatprep.mubr.bf16.mxu0 0
      %1186 = vmatmul.mubr.bf16.gmra.mrb[0].mxu0 %v1039
      %v1187 = vpop.f32.mrb[0].mxu0
      %v1188 = vadd.f32 %v1063, %v1187
      %v1189 = vpop.f32.mrb[0].mxu0
      %v1190 = vpop.f32.mrb[0].mxu0
      %v1191 = vadd.f32 %v1063, %v1190
      %v1192 = vpop.f32.mrb[0].mxu0
      %1193 = vmatprep.mubr.bf16.mxu0 0
      %1194 = vmatmul.mubr.bf16.gmra.mrb[0].mxu0 %v1040
      %v1195 = vpop.f32.mrb[0].mxu0
      %v1196 = vadd.f32 %v1063, %v1195
      %v1197 = vpop.f32.mrb[0].mxu0
      %v1198 = vpop.f32.mrb[0].mxu0
      %v1199 = vadd.f32 %v1063, %v1198
      %v1200 = vpop.f32.mrb[0].mxu0
      %1201 = vmatprep.mubr.bf16.mxu0 0
      %1202 = vmatmul.mubr.bf16.gmra.mrb[0].mxu0 %v1041
      %v1203 = vpop.f32.mrb[0].mxu0
      %v1204 = vadd.f32 %v1063, %v1203
      %v1205 = vpop.f32.mrb[0].mxu0
      %v1206 = vpop.f32.mrb[0].mxu0
      %v1207 = vadd.f32 %v1063, %v1206
      %v1208 = vpop.f32.mrb[0].mxu0
      %1209 = vdwg.mxu0
      %v1210 = vmax.f32 %v1148, 0.0
      %v1211 = vmax.f32 %v1151, 0.0
      %v1212 = vmax.f32 %v1156, 0.0
      %v1213 = vmax.f32 %v1159, 0.0
      %v1214 = vmax.f32 %v1164, 0.0
      %v1215 = vmax.f32 %v1167, 0.0
      %v1216 = vmax.f32 %v1172, 0.0
      %v1217 = vmax.f32 %v1175, 0.0
      %v1218 = vmax.f32 %v1180, 0.0
      %v1219 = vmax.f32 %v1183, 0.0
      %v1220 = vmax.f32 %v1188, 0.0
      %v1221 = vmax.f32 %v1191, 0.0
      %v1222 = vmax.f32 %v1196, 0.0
      %v1223 = vmax.f32 %v1199, 0.0
      %v1224 = vmax.f32 %v1204, 0.0
      %v1225 = vmax.f32 %v1207, 0.0
      %v1226 = vpack.c.bf16 %v1211, %v1210
      %v1227 = vpack.c.bf16 %v1213, %v1212
      %v1228 = vpack.c.bf16 %v1215, %v1214
      %v1229 = vpack.c.bf16 %v1217, %v1216
      %v1230 = vpack.c.bf16 %v1219, %v1218
      %v1231 = vpack.c.bf16 %v1221, %v1220
      %v1232 = vpack.c.bf16 %v1223, %v1222
      %v1233 = vpack.c.bf16 %v1225, %v1224
      %v1234 = vld [vmem:[%s7] sm:$0xf]
      %v1235 = vld [vmem:[%s7 + $0x4] sm:$0xf]
      %v1236 = vld [vmem:[%s7 + $0x8] sm:$0xf]
      %v1237 = vld [vmem:[%s7 + $0xc] sm:$0xf]
      %v1238 = vld [vmem:[%s7 + $0x10] sm:$0xf]
      %v1239 = vld [vmem:[%s7 + $0x14] sm:$0xf]
      %v1240 = vld [vmem:[%s7 + $0x18] sm:$0xf]
      %v1241 = vld [vmem:[%s7 + $0x1c] sm:$0xf]
      %v1242 = vld [vmem:[%s7 + $0x20] sm:$0xf]
      %v1243 = vld [vmem:[%s7 + $0x24] sm:$0xf]
      %v1244 = vld [vmem:[%s7 + $0x28] sm:$0xf]
      %v1245 = vld [vmem:[%s7 + $0x2c] sm:$0xf]
      %v1246 = vld [vmem:[%s7 + $0x30] sm:$0xf]
      %v1247 = vld [vmem:[%s7 + $0x34] sm:$0xf]
      %v1248 = vld [vmem:[%s7 + $0x38] sm:$0xf]
      %v1249 = vld [vmem:[%s7 + $0x3c] sm:$0xf]
      %v1250 = vld [vmem:[%s8] sm:$0x1]
      %v1252 = vlaneseq
      %v1253 = vshrl.u32 %v1252, 7
      %v1254 = vsub.s32 0, %v1253
      %v1255 = vrot.slane %v1250, %v1254
      %v1273 = vunpack.c.l.b16 %v1234
      %v1274 = vunpack.c.l.b16 %v1235
      %v1275 = vunpack.c.l.b16 %v1236
      %v1276 = vunpack.c.l.b16 %v1237
      %v1277 = vunpack.c.l.b16 %v1238
      %v1278 = vunpack.c.l.b16 %v1239
      %v1279 = vunpack.c.l.b16 %v1240
      %v1280 = vunpack.c.l.b16 %v1241
      %v1281 = vunpack.c.l.b16 %v1242
      %v1282 = vunpack.c.l.b16 %v1243
      %v1283 = vunpack.c.l.b16 %v1244
      %v1284 = vunpack.c.l.b16 %v1245
      %v1285 = vunpack.c.l.b16 %v1246
      %v1286 = vunpack.c.l.b16 %v1247
      %v1287 = vunpack.c.l.b16 %v1248
      %v1288 = vunpack.c.l.b16 %v1249
      %v1289 = vpack.c.b16 %v1274, %v1273
      %v1290 = vpack.c.b16 %v1276, %v1275
      %v1291 = vpack.c.b16 %v1278, %v1277
      %v1292 = vpack.c.b16 %v1280, %v1279
      %v1293 = vpack.c.b16 %v1282, %v1281
      %v1294 = vpack.c.b16 %v1284, %v1283
      %v1295 = vpack.c.b16 %v1286, %v1285
      %v1296 = vpack.c.b16 %v1288, %v1287
      %1305 = vmatprep.subr.bf16.mxu0 0
      %1306 = vmatpush1.bf16.msra.mxu0 %v1289
      %1307 = vmatprep.subr.bf16.mxu0 0
      %1308 = vmatpush1.bf16.msra.mxu0 %v1290
      %1309 = vmatprep.subr.bf16.mxu0 0
      %1310 = vmatpush1.bf16.msra.mxu0 %v1291
      %1311 = vmatprep.subr.bf16.mxu0 0
      %1312 = vmatpush1.bf16.msra.mxu0 %v1292
      %1313 = vmatprep.subr.bf16.mxu0 0
      %1314 = vmatpush1.bf16.msra.mxu0 %v1293
      %1315 = vmatprep.subr.bf16.mxu0 0
      %1316 = vmatpush1.bf16.msra.mxu0 %v1294
      %1317 = vmatprep.subr.bf16.mxu0 0
      %1318 = vmatpush1.bf16.msra.mxu0 %v1295
      %1319 = vmatprep.subr.bf16.mxu0 0
      %1320 = vmatpush1.bf16.msra.mxu0 %v1296
      %1321 = vmatprep.subr.bf16.mxu0 0
      %1322 = vmatpush1.bf16.msra.mxu0 0
      %1323 = vmatprep.subr.bf16.mxu0 0
      %1324 = vmatpush1.bf16.msra.mxu0 0
      %1325 = vmatprep.subr.bf16.mxu0 0
      %1326 = vmatpush1.bf16.msra.mxu0 0
      %1327 = vmatprep.subr.bf16.mxu0 0
      %1328 = vmatpush1.bf16.msra.mxu0 0
      %1329 = vmatprep.subr.bf16.mxu0 0
      %1330 = vmatpush1.bf16.msra.mxu0 0
      %1331 = vmatprep.subr.bf16.mxu0 0
      %1332 = vmatpush1.bf16.msra.mxu0 0
      %1333 = vmatprep.subr.bf16.mxu0 0
      %1334 = vmatpush1.bf16.msra.mxu0 0
      %1335 = vmatprep.subr.bf16.mxu0 0
      %1336 = vmatpush1.bf16.msra.mxu0 0
      %1337 = vmatprep.mubr.bf16.mxu0 0
      %1338 = vmatmul.mubr.bf16.gmra.mrb[0].mxu0 %v1226
      %v1339 = vpop.f32.mrb[0].mxu0
      %v1340 = vadd.f32 %v1255, %v1339
      %v1341 = vpop.f32.mrb[0].mxu0
      %v1342 = vpop.f32.mrb[0].mxu0
      %v1343 = vadd.f32 %v1255, %v1342
      %v1344 = vpop.f32.mrb[0].mxu0
      %1345 = vmatprep.mubr.bf16.mxu0 0
      %1346 = vmatmul.mubr.bf16.gmra.mrb[0].mxu0 %v1227
      %v1347 = vpop.f32.mrb[0].mxu0
      %v1348 = vadd.f32 %v1255, %v1347
      %v1349 = vpop.f32.mrb[0].mxu0
      %v1350 = vpop.f32.mrb[0].mxu0
      %v1351 = vadd.f32 %v1255, %v1350
      %v1352 = vpop.f32.mrb[0].mxu0
      %1353 = vmatprep.mubr.bf16.mxu0 0
      %1354 = vmatmul.mubr.bf16.gmra.mrb[0].mxu0 %v1228
      %v1355 = vpop.f32.mrb[0].mxu0
      %v1356 = vadd.f32 %v1255, %v1355
      %v1357 = vpop.f32.mrb[0].mxu0
      %v1358 = vpop.f32.mrb[0].mxu0
      %v1359 = vadd.f32 %v1255, %v1358
      %v1360 = vpop.f32.mrb[0].mxu0
      %1361 = vmatprep.mubr.bf16.mxu0 0
      %1362 = vmatmul.mubr.bf16.gmra.mrb[0].mxu0 %v1229
      %v1363 = vpop.f32.mrb[0].mxu0
      %v1364 = vadd.f32 %v1255, %v1363
      %v1365 = vpop.f32.mrb[0].mxu0
      %v1366 = vpop.f32.mrb[0].mxu0
      %v1367 = vadd.f32 %v1255, %v1366
      %v1368 = vpop.f32.mrb[0].mxu0
      %1369 = vmatprep.mubr.bf16.mxu0 0
      %1370 = vmatmul.mubr.bf16.gmra.mrb[0].mxu0 %v1230
      %v1371 = vpop.f32.mrb[0].mxu0
      %v1372 = vadd.f32 %v1255, %v1371
      %v1373 = vpop.f32.mrb[0].mxu0
      %v1374 = vpop.f32.mrb[0].mxu0
      %v1375 = vadd.f32 %v1255, %v1374
      %v1376 = vpop.f32.mrb[0].mxu0
      %1377 = vmatprep.mubr.bf16.mxu0 0
      %1378 = vmatmul.mubr.bf16.gmra.mrb[0].mxu0 %v1231
      %v1379 = vpop.f32.mrb[0].mxu0
      %v1380 = vadd.f32 %v1255, %v1379
      %v1381 = vpop.f32.mrb[0].mxu0
      %v1382 = vpop.f32.mrb[0].mxu0
      %v1383 = vadd.f32 %v1255, %v1382
      %v1384 = vpop.f32.mrb[0].mxu0
      %1385 = vmatprep.mubr.bf16.mxu0 0
      %1386 = vmatmul.mubr.bf16.gmra.mrb[0].mxu0 %v1232
      %v1387 = vpop.f32.mrb[0].mxu0
      %v1388 = vadd.f32 %v1255, %v1387
      %v1389 = vpop.f32.mrb[0].mxu0
      %v1390 = vpop.f32.mrb[0].mxu0
      %v1391 = vadd.f32 %v1255, %v1390
      %v1392 = vpop.f32.mrb[0].mxu0
      %1393 = vmatprep.mubr.bf16.mxu0 0
      %1394 = vmatmul.mubr.bf16.gmra.mrb[0].mxu0 %v1233
      %v1395 = vpop.f32.mrb[0].mxu0
      %v1396 = vadd.f32 %v1255, %v1395
      %v1397 = vpop.f32.mrb[0].mxu0
      %v1398 = vpop.f32.mrb[0].mxu0
      %v1399 = vadd.f32 %v1255, %v1398
      %v1400 = vpop.f32.mrb[0].mxu0
      %1401 = vdwg.mxu0
      %1402 = vst [vmem:[%s585] sm:$0xff] %v1340
      %1403 = vst [vmem:[%s585 + $0x8] sm:$0xff] %v1343
      %1404 = vst [vmem:[%s585 + $0x10] sm:$0xff] %v1348
      %1405 = vst [vmem:[%s585 + $0x18] sm:$0xff] %v1351
      %1406 = vst [vmem:[%s585 + $0x20] sm:$0xff] %v1356
      %1407 = vst [vmem:[%s585 + $0x28] sm:$0xff] %v1359
      %1408 = vst [vmem:[%s585 + $0x30] sm:$0xff] %v1364
      %1409 = vst [vmem:[%s585 + $0x38] sm:$0xff] %v1367
      %1410 = vst [vmem:[%s585 + $0x40] sm:$0xff] %v1372
      %1411 = vst [vmem:[%s585 + $0x48] sm:$0xff] %v1375
      %1412 = vst [vmem:[%s585 + $0x50] sm:$0xff] %v1380
      %1413 = vst [vmem:[%s585 + $0x58] sm:$0xff] %v1383
      %1414 = vst [vmem:[%s585 + $0x60] sm:$0xff] %v1388
      %1415 = vst [vmem:[%s585 + $0x68] sm:$0xff] %v1391
      %1416 = vst [vmem:[%s585 + $0x70] sm:$0xff] %v1396
      %1417 = vst [vmem:[%s585 + $0x78] sm:$0xff] %v1399
      %v1418 = vpack.c.bf16 %v1343, %v1340
      %v1419 = vpack.c.bf16 %v1351, %v1348
      %v1420 = vpack.c.bf16 %v1359, %v1356
      %v1421 = vpack.c.bf16 %v1367, %v1364
      %v1422 = vpack.c.bf16 %v1375, %v1372
      %v1423 = vpack.c.bf16 %v1383, %v1380
      %v1424 = vpack.c.bf16 %v1391, %v1388
      %v1425 = vpack.c.bf16 %v1399, %v1396
      %v1426 = vld [vmem:[%s9] sm:$0xf]
      %v1427 = vld [vmem:[%s9 + $0x4] sm:$0xf]
      %v1428 = vld [vmem:[%s9 + $0x8] sm:$0xf]
      %v1429 = vld [vmem:[%s9 + $0xc] sm:$0xf]
      %v1430 = vld [vmem:[%s9 + $0x10] sm:$0xf]
      %v1431 = vld [vmem:[%s9 + $0x14] sm:$0xf]
      %v1432 = vld [vmem:[%s9 + $0x18] sm:$0xf]
      %v1433 = vld [vmem:[%s9 + $0x1c] sm:$0xf]
      %v1434 = vld [vmem:[%s9 + $0x20] sm:$0xf]
      %v1435 = vld [vmem:[%s9 + $0x24] sm:$0xf]
      %v1436 = vld [vmem:[%s9 + $0x28] sm:$0xf]
      %v1437 = vld [vmem:[%s9 + $0x2c] sm:$0xf]
      %v1438 = vld [vmem:[%s9 + $0x30] sm:$0xf]
      %v1439 = vld [vmem:[%s9 + $0x34] sm:$0xf]
      %v1440 = vld [vmem:[%s9 + $0x38] sm:$0xf]
      %v1441 = vld [vmem:[%s9 + $0x3c] sm:$0xf]
      %v1442 = vld [vmem:[%s10] sm:$0x1]
      %v1444 = vlaneseq
      %v1445 = vshrl.u32 %v1444, 7
      %v1446 = vsub.s32 0, %v1445
      %v1447 = vrot.slane %v1442, %v1446
      %v1465 = vunpack.c.l.b16 %v1426
      %v1466 = vunpack.c.l.b16 %v1427
      %v1467 = vunpack.c.l.b16 %v1428
      %v1468 = vunpack.c.l.b16 %v1429
      %v1469 = vunpack.c.l.b16 %v1430
      %v1470 = vunpack.c.l.b16 %v1431
      %v1471 = vunpack.c.l.b16 %v1432
      %v1472 = vunpack.c.l.b16 %v1433
      %v1473 = vunpack.c.l.b16 %v1434
      %v1474 = vunpack.c.l.b16 %v1435
      %v1475 = vunpack.c.l.b16 %v1436
      %v1476 = vunpack.c.l.b16 %v1437
      %v1477 = vunpack.c.l.b16 %v1438
      %v1478 = vunpack.c.l.b16 %v1439
      %v1479 = vunpack.c.l.b16 %v1440
      %v1480 = vunpack.c.l.b16 %v1441
      %v1481 = vpack.c.b16 %v1466, %v1465
      %v1482 = vpack.c.b16 %v1468, %v1467
      %v1483 = vpack.c.b16 %v1470, %v1469
      %v1484 = vpack.c.b16 %v1472, %v1471
      %v1485 = vpack.c.b16 %v1474, %v1473
      %v1486 = vpack.c.b16 %v1476, %v1475
      %v1487 = vpack.c.b16 %v1478, %v1477
      %v1488 = vpack.c.b16 %v1480, %v1479
      %1497 = vmatprep.subr.bf16.mxu0 0
      %1498 = vmatpush1.bf16.msra.mxu0 %v1481
      %1499 = vmatprep.subr.bf16.mxu0 0
      %1500 = vmatpush1.bf16.msra.mxu0 %v1482
      %1501 = vmatprep.subr.bf16.mxu0 0
      %1502 = vmatpush1.bf16.msra.mxu0 %v1483
      %1503 = vmatprep.subr.bf16.mxu0 0
      %1504 = vmatpush1.bf16.msra.mxu0 %v1484
      %1505 = vmatprep.subr.bf16.mxu0 0
      %1506 = vmatpush1.bf16.msra.mxu0 %v1485
      %1507 = vmatprep.subr.bf16.mxu0 0
      %1508 = vmatpush1.bf16.msra.mxu0 %v1486
      %1509 = vmatprep.subr.bf16.mxu0 0
      %1510 = vmatpush1.bf16.msra.mxu0 %v1487
      %1511 = vmatprep.subr.bf16.mxu0 0
      %1512 = vmatpush1.bf16.msra.mxu0 %v1488
      %1513 = vmatprep.subr.bf16.mxu0 0
      %1514 = vmatpush1.bf16.msra.mxu0 0
      %1515 = vmatprep.subr.bf16.mxu0 0
      %1516 = vmatpush1.bf16.msra.mxu0 0
      %1517 = vmatprep.subr.bf16.mxu0 0
      %1518 = vmatpush1.bf16.msra.mxu0 0
      %1519 = vmatprep.subr.bf16.mxu0 0
      %1520 = vmatpush1.bf16.msra.mxu0 0
      %1521 = vmatprep.subr.bf16.mxu0 0
      %1522 = vmatpush1.bf16.msra.mxu0 0
      %1523 = vmatprep.subr.bf16.mxu0 0
      %1524 = vmatpush1.bf16.msra.mxu0 0
      %1525 = vmatprep.subr.bf16.mxu0 0
      %1526 = vmatpush1.bf16.msra.mxu0 0
      %1527 = vmatprep.subr.bf16.mxu0 0
      %1528 = vmatpush1.bf16.msra.mxu0 0
      %1529 = vmatprep.mubr.bf16.mxu0 0
      %1530 = vmatmul.mubr.bf16.gmra.mrb[0].mxu0 %v1418
      %v1531 = vpop.f32.mrb[0].mxu0
      %v1532 = vadd.f32 %v1447, %v1531
      %v1533 = vpop.f32.mrb[0].mxu0
      %v1534 = vpop.f32.mrb[0].mxu0
      %v1535 = vadd.f32 %v1447, %v1534
      %v1536 = vpop.f32.mrb[0].mxu0
      %1537 = vmatprep.mubr.bf16.mxu0 0
      %1538 = vmatmul.mubr.bf16.gmra.mrb[0].mxu0 %v1419
      %v1539 = vpop.f32.mrb[0].mxu0
      %v1540 = vadd.f32 %v1447, %v1539
      %v1541 = vpop.f32.mrb[0].mxu0
      %v1542 = vpop.f32.mrb[0].mxu0
      %v1543 = vadd.f32 %v1447, %v1542
      %v1544 = vpop.f32.mrb[0].mxu0
      %1545 = vmatprep.mubr.bf16.mxu0 0
      %1546 = vmatmul.mubr.bf16.gmra.mrb[0].mxu0 %v1420
      %v1547 = vpop.f32.mrb[0].mxu0
      %v1548 = vadd.f32 %v1447, %v1547
      %v1549 = vpop.f32.mrb[0].mxu0
      %v1550 = vpop.f32.mrb[0].mxu0
      %v1551 = vadd.f32 %v1447, %v1550
      %v1552 = vpop.f32.mrb[0].mxu0
      %1553 = vmatprep.mubr.bf16.mxu0 0
      %1554 = vmatmul.mubr.bf16.gmra.mrb[0].mxu0 %v1421
      %v1555 = vpop.f32.mrb[0].mxu0
      %v1556 = vadd.f32 %v1447, %v1555
      %v1557 = vpop.f32.mrb[0].mxu0
      %v1558 = vpop.f32.mrb[0].mxu0
      %v1559 = vadd.f32 %v1447, %v1558
      %v1560 = vpop.f32.mrb[0].mxu0
      %1561 = vmatprep.mubr.bf16.mxu0 0
      %1562 = vmatmul.mubr.bf16.gmra.mrb[0].mxu0 %v1422
      %v1563 = vpop.f32.mrb[0].mxu0
      %v1564 = vadd.f32 %v1447, %v1563
      %v1565 = vpop.f32.mrb[0].mxu0
      %v1566 = vpop.f32.mrb[0].mxu0
      %v1567 = vadd.f32 %v1447, %v1566
      %v1568 = vpop.f32.mrb[0].mxu0
      %1569 = vmatprep.mubr.bf16.mxu0 0
      %1570 = vmatmul.mubr.bf16.gmra.mrb[0].mxu0 %v1423
      %v1571 = vpop.f32.mrb[0].mxu0
      %v1572 = vadd.f32 %v1447, %v1571
      %v1573 = vpop.f32.mrb[0].mxu0
      %v1574 = vpop.f32.mrb[0].mxu0
      %v1575 = vadd.f32 %v1447, %v1574
      %v1576 = vpop.f32.mrb[0].mxu0
      %1577 = vmatprep.mubr.bf16.mxu0 0
      %1578 = vmatmul.mubr.bf16.gmra.mrb[0].mxu0 %v1424
      %v1579 = vpop.f32.mrb[0].mxu0
      %v1580 = vadd.f32 %v1447, %v1579
      %v1581 = vpop.f32.mrb[0].mxu0
      %v1582 = vpop.f32.mrb[0].mxu0
      %v1583 = vadd.f32 %v1447, %v1582
      %v1584 = vpop.f32.mrb[0].mxu0
      %1585 = vmatprep.mubr.bf16.mxu0 0
      %1586 = vmatmul.mubr.bf16.gmra.mrb[0].mxu0 %v1425
      %v1587 = vpop.f32.mrb[0].mxu0
      %v1588 = vadd.f32 %v1447, %v1587
      %v1589 = vpop.f32.mrb[0].mxu0
      %v1590 = vpop.f32.mrb[0].mxu0
      %v1591 = vadd.f32 %v1447, %v1590
      %v1592 = vpop.f32.mrb[0].mxu0
      %1593 = vdwg.mxu0
      %v1594 = vmax.f32 %v1532, 0.0
      %v1595 = vmax.f32 %v1535, 0.0
      %v1596 = vmax.f32 %v1540, 0.0
      %v1597 = vmax.f32 %v1543, 0.0
      %v1598 = vmax.f32 %v1548, 0.0
      %v1599 = vmax.f32 %v1551, 0.0
      %v1600 = vmax.f32 %v1556, 0.0
      %v1601 = vmax.f32 %v1559, 0.0
      %v1602 = vmax.f32 %v1564, 0.0
      %v1603 = vmax.f32 %v1567, 0.0
      %v1604 = vmax.f32 %v1572, 0.0
      %v1605 = vmax.f32 %v1575, 0.0
      %v1606 = vmax.f32 %v1580, 0.0
      %v1607 = vmax.f32 %v1583, 0.0
      %v1608 = vmax.f32 %v1588, 0.0
      %v1609 = vmax.f32 %v1591, 0.0
      %v1610 = vpack.c.bf16 %v1595, %v1594
      %v1611 = vpack.c.bf16 %v1597, %v1596
      %v1612 = vpack.c.bf16 %v1599, %v1598
      %v1613 = vpack.c.bf16 %v1601, %v1600
      %v1614 = vpack.c.bf16 %v1603, %v1602
      %v1615 = vpack.c.bf16 %v1605, %v1604
      %v1616 = vpack.c.bf16 %v1607, %v1606
      %v1617 = vpack.c.bf16 %v1609, %v1608
      %v1618 = vld [vmem:[%s11] sm:$0xf]
      %v1619 = vld [vmem:[%s11 + $0x4] sm:$0xf]
      %v1620 = vld [vmem:[%s11 + $0x8] sm:$0xf]
      %v1621 = vld [vmem:[%s11 + $0xc] sm:$0xf]
      %v1622 = vld [vmem:[%s11 + $0x10] sm:$0xf]
      %v1623 = vld [vmem:[%s11 + $0x14] sm:$0xf]
      %v1624 = vld [vmem:[%s11 + $0x18] sm:$0xf]
      %v1625 = vld [vmem:[%s11 + $0x1c] sm:$0xf]
      %v1626 = vld [vmem:[%s11 + $0x20] sm:$0xf]
      %v1627 = vld [vmem:[%s11 + $0x24] sm:$0xf]
      %v1628 = vld [vmem:[%s11 + $0x28] sm:$0xf]
      %v1629 = vld [vmem:[%s11 + $0x2c] sm:$0xf]
      %v1630 = vld [vmem:[%s11 + $0x30] sm:$0xf]
      %v1631 = vld [vmem:[%s11 + $0x34] sm:$0xf]
      %v1632 = vld [vmem:[%s11 + $0x38] sm:$0xf]
      %v1633 = vld [vmem:[%s11 + $0x3c] sm:$0xf]
      %v1634 = vld [vmem:[%s12] sm:$0x1]
      %v1636 = vlaneseq
      %v1637 = vshrl.u32 %v1636, 7
      %v1638 = vsub.s32 0, %v1637
      %v1639 = vrot.slane %v1634, %v1638
      %v1657 = vunpack.c.l.b16 %v1618
      %v1658 = vunpack.c.l.b16 %v1619
      %v1659 = vunpack.c.l.b16 %v1620
      %v1660 = vunpack.c.l.b16 %v1621
      %v1661 = vunpack.c.l.b16 %v1622
      %v1662 = vunpack.c.l.b16 %v1623
      %v1663 = vunpack.c.l.b16 %v1624
      %v1664 = vunpack.c.l.b16 %v1625
      %v1665 = vunpack.c.l.b16 %v1626
      %v1666 = vunpack.c.l.b16 %v1627
      %v1667 = vunpack.c.l.b16 %v1628
      %v1668 = vunpack.c.l.b16 %v1629
      %v1669 = vunpack.c.l.b16 %v1630
      %v1670 = vunpack.c.l.b16 %v1631
      %v1671 = vunpack.c.l.b16 %v1632
      %v1672 = vunpack.c.l.b16 %v1633
      %v1673 = vpack.c.b16 %v1658, %v1657
      %v1674 = vpack.c.b16 %v1660, %v1659
      %v1675 = vpack.c.b16 %v1662, %v1661
      %v1676 = vpack.c.b16 %v1664, %v1663
      %v1677 = vpack.c.b16 %v1666, %v1665
      %v1678 = vpack.c.b16 %v1668, %v1667
      %v1679 = vpack.c.b16 %v1670, %v1669
      %v1680 = vpack.c.b16 %v1672, %v1671
      %1689 = vmatprep.subr.bf16.mxu0 0
      %1690 = vmatpush1.bf16.msra.mxu0 %v1673
      %1691 = vmatprep.subr.bf16.mxu0 0
      %1692 = vmatpush1.bf16.msra.mxu0 %v1674
      %1693 = vmatprep.subr.bf16.mxu0 0
      %1694 = vmatpush1.bf16.msra.mxu0 %v1675
      %1695 = vmatprep.subr.bf16.mxu0 0
      %1696 = vmatpush1.bf16.msra.mxu0 %v1676
      %1697 = vmatprep.subr.bf16.mxu0 0
      %1698 = vmatpush1.bf16.msra.mxu0 %v1677
      %1699 = vmatprep.subr.bf16.mxu0 0
      %1700 = vmatpush1.bf16.msra.mxu0 %v1678
      %1701 = vmatprep.subr.bf16.mxu0 0
      %1702 = vmatpush1.bf16.msra.mxu0 %v1679
      %1703 = vmatprep.subr.bf16.mxu0 0
      %1704 = vmatpush1.bf16.msra.mxu0 %v1680
      %1705 = vmatprep.subr.bf16.mxu0 0
      %1706 = vmatpush1.bf16.msra.mxu0 0
      %1707 = vmatprep.subr.bf16.mxu0 0
      %1708 = vmatpush1.bf16.msra.mxu0 0
      %1709 = vmatprep.subr.bf16.mxu0 0
      %1710 = vmatpush1.bf16.msra.mxu0 0
      %1711 = vmatprep.subr.bf16.mxu0 0
      %1712 = vmatpush1.bf16.msra.mxu0 0
      %1713 = vmatprep.subr.bf16.mxu0 0
      %1714 = vmatpush1.bf16.msra.mxu0 0
      %1715 = vmatprep.subr.bf16.mxu0 0
      %1716 = vmatpush1.bf16.msra.mxu0 0
      %1717 = vmatprep.subr.bf16.mxu0 0
      %1718 = vmatpush1.bf16.msra.mxu0 0
      %1719 = vmatprep.subr.bf16.mxu0 0
      %1720 = vmatpush1.bf16.msra.mxu0 0
      %1721 = vmatprep.mubr.bf16.mxu0 0
      %1722 = vmatmul.mubr.bf16.gmra.mrb[0].mxu0 %v1610
      %v1723 = vpop.f32.mrb[0].mxu0
      %v1724 = vadd.f32 %v1639, %v1723
      %v1725 = vpop.f32.mrb[0].mxu0
      %v1726 = vpop.f32.mrb[0].mxu0
      %v1727 = vadd.f32 %v1639, %v1726
      %v1728 = vpop.f32.mrb[0].mxu0
      %1729 = vmatprep.mubr.bf16.mxu0 0
      %1730 = vmatmul.mubr.bf16.gmra.mrb[0].mxu0 %v1611
      %v1731 = vpop.f32.mrb[0].mxu0
      %v1732 = vadd.f32 %v1639, %v1731
      %v1733 = vpop.f32.mrb[0].mxu0
      %v1734 = vpop.f32.mrb[0].mxu0
      %v1735 = vadd.f32 %v1639, %v1734
      %v1736 = vpop.f32.mrb[0].mxu0
      %1737 = vmatprep.mubr.bf16.mxu0 0
      %1738 = vmatmul.mubr.bf16.gmra.mrb[0].mxu0 %v1612
      %v1739 = vpop.f32.mrb[0].mxu0
      %v1740 = vadd.f32 %v1639, %v1739
      %v1741 = vpop.f32.mrb[0].mxu0
      %v1742 = vpop.f32.mrb[0].mxu0
      %v1743 = vadd.f32 %v1639, %v1742
      %v1744 = vpop.f32.mrb[0].mxu0
      %1745 = vmatprep.mubr.bf16.mxu0 0
      %1746 = vmatmul.mubr.bf16.gmra.mrb[0].mxu0 %v1613
      %v1747 = vpop.f32.mrb[0].mxu0
      %v1748 = vadd.f32 %v1639, %v1747
      %v1749 = vpop.f32.mrb[0].mxu0
      %v1750 = vpop.f32.mrb[0].mxu0
      %v1751 = vadd.f32 %v1639, %v1750
      %v1752 = vpop.f32.mrb[0].mxu0
      %1753 = vmatprep.mubr.bf16.mxu0 0
      %1754 = vmatmul.mubr.bf16.gmra.mrb[0].mxu0 %v1614
      %v1755 = vpop.f32.mrb[0].mxu0
      %v1756 = vadd.f32 %v1639, %v1755
      %v1757 = vpop.f32.mrb[0].mxu0
      %v1758 = vpop.f32.mrb[0].mxu0
      %v1759 = vadd.f32 %v1639, %v1758
      %v1760 = vpop.f32.mrb[0].mxu0
      %1761 = vmatprep.mubr.bf16.mxu0 0
      %1762 = vmatmul.mubr.bf16.gmra.mrb[0].mxu0 %v1615
      %v1763 = vpop.f32.mrb[0].mxu0
      %v1764 = vadd.f32 %v1639, %v1763
      %v1765 = vpop.f32.mrb[0].mxu0
      %v1766 = vpop.f32.mrb[0].mxu0
      %v1767 = vadd.f32 %v1639, %v1766
      %v1768 = vpop.f32.mrb[0].mxu0
      %1769 = vmatprep.mubr.bf16.mxu0 0
      %1770 = vmatmul.mubr.bf16.gmra.mrb[0].mxu0 %v1616
      %v1771 = vpop.f32.mrb[0].mxu0
      %v1772 = vadd.f32 %v1639, %v1771
      %v1773 = vpop.f32.mrb[0].mxu0
      %v1774 = vpop.f32.mrb[0].mxu0
      %v1775 = vadd.f32 %v1639, %v1774
      %v1776 = vpop.f32.mrb[0].mxu0
      %1777 = vmatprep.mubr.bf16.mxu0 0
      %1778 = vmatmul.mubr.bf16.gmra.mrb[0].mxu0 %v1617
      %v1779 = vpop.f32.mrb[0].mxu0
      %v1780 = vadd.f32 %v1639, %v1779
      %v1781 = vpop.f32.mrb[0].mxu0
      %v1782 = vpop.f32.mrb[0].mxu0
      %v1783 = vadd.f32 %v1639, %v1782
      %v1784 = vpop.f32.mrb[0].mxu0
      %1785 = vdwg.mxu0
      %v1786 = vmax.f32 %v1724, 0.0
      %v1787 = vmax.f32 %v1727, 0.0
      %v1788 = vmax.f32 %v1732, 0.0
      %v1789 = vmax.f32 %v1735, 0.0
      %v1790 = vmax.f32 %v1740, 0.0
      %v1791 = vmax.f32 %v1743, 0.0
      %v1792 = vmax.f32 %v1748, 0.0
      %v1793 = vmax.f32 %v1751, 0.0
      %v1794 = vmax.f32 %v1756, 0.0
      %v1795 = vmax.f32 %v1759, 0.0
      %v1796 = vmax.f32 %v1764, 0.0
      %v1797 = vmax.f32 %v1767, 0.0
      %v1798 = vmax.f32 %v1772, 0.0
      %v1799 = vmax.f32 %v1775, 0.0
      %v1800 = vmax.f32 %v1780, 0.0
      %v1801 = vmax.f32 %v1783, 0.0
      %v1802 = vpack.c.bf16 %v1787, %v1786
      %v1803 = vpack.c.bf16 %v1789, %v1788
      %v1804 = vpack.c.bf16 %v1791, %v1790
      %v1805 = vpack.c.bf16 %v1793, %v1792
      %v1806 = vpack.c.bf16 %v1795, %v1794
      %v1807 = vpack.c.bf16 %v1797, %v1796
      %v1808 = vpack.c.bf16 %v1799, %v1798
      %v1809 = vpack.c.bf16 %v1801, %v1800
      %v1810 = vld [vmem:[%s13] sm:$0xf]
      %v1811 = vld [vmem:[%s13 + $0x4] sm:$0xf]
      %v1812 = vld [vmem:[%s13 + $0x8] sm:$0xf]
      %v1813 = vld [vmem:[%s13 + $0xc] sm:$0xf]
      %v1814 = vld [vmem:[%s13 + $0x10] sm:$0xf]
      %v1815 = vld [vmem:[%s13 + $0x14] sm:$0xf]
      %v1816 = vld [vmem:[%s13 + $0x18] sm:$0xf]
      %v1817 = vld [vmem:[%s13 + $0x1c] sm:$0xf]
      %v1818 = vld [vmem:[%s13 + $0x20] sm:$0xf]
      %v1819 = vld [vmem:[%s13 + $0x24] sm:$0xf]
      %v1820 = vld [vmem:[%s13 + $0x28] sm:$0xf]
      %v1821 = vld [vmem:[%s13 + $0x2c] sm:$0xf]
      %v1822 = vld [vmem:[%s13 + $0x30] sm:$0xf]
      %v1823 = vld [vmem:[%s13 + $0x34] sm:$0xf]
      %v1824 = vld [vmem:[%s13 + $0x38] sm:$0xf]
      %v1825 = vld [vmem:[%s13 + $0x3c] sm:$0xf]
      %v1826 = vld [vmem:[%s14] sm:$0x1]
      %v1828 = vlaneseq
      %v1829 = vshrl.u32 %v1828, 7
      %v1830 = vsub.s32 0, %v1829
      %v1831 = vrot.slane %v1826, %v1830
      %v1849 = vunpack.c.l.b16 %v1810
      %v1850 = vunpack.c.l.b16 %v1811
      %v1851 = vunpack.c.l.b16 %v1812
      %v1852 = vunpack.c.l.b16 %v1813
      %v1853 = vunpack.c.l.b16 %v1814
      %v1854 = vunpack.c.l.b16 %v1815
      %v1855 = vunpack.c.l.b16 %v1816
      %v1856 = vunpack.c.l.b16 %v1817
      %v1857 = vunpack.c.l.b16 %v1818
      %v1858 = vunpack.c.l.b16 %v1819
      %v1859 = vunpack.c.l.b16 %v1820
      %v1860 = vunpack.c.l.b16 %v1821
      %v1861 = vunpack.c.l.b16 %v1822
      %v1862 = vunpack.c.l.b16 %v1823
      %v1863 = vunpack.c.l.b16 %v1824
      %v1864 = vunpack.c.l.b16 %v1825
      %v1865 = vpack.c.b16 %v1850, %v1849
      %v1866 = vpack.c.b16 %v1852, %v1851
      %v1867 = vpack.c.b16 %v1854, %v1853
      %v1868 = vpack.c.b16 %v1856, %v1855
      %v1869 = vpack.c.b16 %v1858, %v1857
      %v1870 = vpack.c.b16 %v1860, %v1859
      %v1871 = vpack.c.b16 %v1862, %v1861
      %v1872 = vpack.c.b16 %v1864, %v1863
      %1881 = vmatprep.subr.bf16.mxu0 0
      %1882 = vmatpush1.bf16.msra.mxu0 %v1865
      %1883 = vmatprep.subr.bf16.mxu0 0
      %1884 = vmatpush1.bf16.msra.mxu0 %v1866
      %1885 = vmatprep.subr.bf16.mxu0 0
      %1886 = vmatpush1.bf16.msra.mxu0 %v1867
      %1887 = vmatprep.subr.bf16.mxu0 0
      %1888 = vmatpush1.bf16.msra.mxu0 %v1868
      %1889 = vmatprep.subr.bf16.mxu0 0
      %1890 = vmatpush1.bf16.msra.mxu0 %v1869
      %1891 = vmatprep.subr.bf16.mxu0 0
      %1892 = vmatpush1.bf16.msra.mxu0 %v1870
      %1893 = vmatprep.subr.bf16.mxu0 0
      %1894 = vmatpush1.bf16.msra.mxu0 %v1871
      %1895 = vmatprep.subr.bf16.mxu0 0
      %1896 = vmatpush1.bf16.msra.mxu0 %v1872
      %1897 = vmatprep.subr.bf16.mxu0 0
      %1898 = vmatpush1.bf16.msra.mxu0 0
      %1899 = vmatprep.subr.bf16.mxu0 0
      %1900 = vmatpush1.bf16.msra.mxu0 0
      %1901 = vmatprep.subr.bf16.mxu0 0
      %1902 = vmatpush1.bf16.msra.mxu0 0
      %1903 = vmatprep.subr.bf16.mxu0 0
      %1904 = vmatpush1.bf16.msra.mxu0 0
      %1905 = vmatprep.subr.bf16.mxu0 0
      %1906 = vmatpush1.bf16.msra.mxu0 0
      %1907 = vmatprep.subr.bf16.mxu0 0
      %1908 = vmatpush1.bf16.msra.mxu0 0
      %1909 = vmatprep.subr.bf16.mxu0 0
      %1910 = vmatpush1.bf16.msra.mxu0 0
      %1911 = vmatprep.subr.bf16.mxu0 0
      %1912 = vmatpush1.bf16.msra.mxu0 0
      %1913 = vmatprep.mubr.bf16.mxu0 0
      %1914 = vmatmul.mubr.bf16.gmra.mrb[0].mxu0 %v1802
      %v1915 = vpop.f32.mrb[0].mxu0
      %v1916 = vadd.f32 %v1831, %v1915
      %v1917 = vpop.f32.mrb[0].mxu0
      %v1918 = vpop.f32.mrb[0].mxu0
      %v1919 = vadd.f32 %v1831, %v1918
      %v1920 = vpop.f32.mrb[0].mxu0
      %1921 = vmatprep.mubr.bf16.mxu0 0
      %1922 = vmatmul.mubr.bf16.gmra.mrb[0].mxu0 %v1803
      %v1923 = vpop.f32.mrb[0].mxu0
      %v1924 = vadd.f32 %v1831, %v1923
      %v1925 = vpop.f32.mrb[0].mxu0
      %v1926 = vpop.f32.mrb[0].mxu0
      %v1927 = vadd.f32 %v1831, %v1926
      %v1928 = vpop.f32.mrb[0].mxu0
      %1929 = vmatprep.mubr.bf16.mxu0 0
      %1930 = vmatmul.mubr.bf16.gmra.mrb[0].mxu0 %v1804
      %v1931 = vpop.f32.mrb[0].mxu0
      %v1932 = vadd.f32 %v1831, %v1931
      %v1933 = vpop.f32.mrb[0].mxu0
      %v1934 = vpop.f32.mrb[0].mxu0
      %v1935 = vadd.f32 %v1831, %v1934
      %v1936 = vpop.f32.mrb[0].mxu0
      %1937 = vmatprep.mubr.bf16.mxu0 0
      %1938 = vmatmul.mubr.bf16.gmra.mrb[0].mxu0 %v1805
      %v1939 = vpop.f32.mrb[0].mxu0
      %v1940 = vadd.f32 %v1831, %v1939
      %v1941 = vpop.f32.mrb[0].mxu0
      %v1942 = vpop.f32.mrb[0].mxu0
      %v1943 = vadd.f32 %v1831, %v1942
      %v1944 = vpop.f32.mrb[0].mxu0
      %1945 = vmatprep.mubr.bf16.mxu0 0
      %1946 = vmatmul.mubr.bf16.gmra.mrb[0].mxu0 %v1806
      %v1947 = vpop.f32.mrb[0].mxu0
      %v1948 = vadd.f32 %v1831, %v1947
      %v1949 = vpop.f32.mrb[0].mxu0
      %v1950 = vpop.f32.mrb[0].mxu0
      %v1951 = vadd.f32 %v1831, %v1950
      %v1952 = vpop.f32.mrb[0].mxu0
      %1953 = vmatprep.mubr.bf16.mxu0 0
      %1954 = vmatmul.mubr.bf16.gmra.mrb[0].mxu0 %v1807
      %v1955 = vpop.f32.mrb[0].mxu0
      %v1956 = vadd.f32 %v1831, %v1955
      %v1957 = vpop.f32.mrb[0].mxu0
      %v1958 = vpop.f32.mrb[0].mxu0
      %v1959 = vadd.f32 %v1831, %v1958
      %v1960 = vpop.f32.mrb[0].mxu0
      %1961 = vmatprep.mubr.bf16.mxu0 0
      %1962 = vmatmul.mubr.bf16.gmra.mrb[0].mxu0 %v1808
      %v1963 = vpop.f32.mrb[0].mxu0
      %v1964 = vadd.f32 %v1831, %v1963
      %v1965 = vpop.f32.mrb[0].mxu0
      %v1966 = vpop.f32.mrb[0].mxu0
      %v1967 = vadd.f32 %v1831, %v1966
      %v1968 = vpop.f32.mrb[0].mxu0
      %1969 = vmatprep.mubr.bf16.mxu0 0
      %1970 = vmatmul.mubr.bf16.gmra.mrb[0].mxu0 %v1809
      %v1971 = vpop.f32.mrb[0].mxu0
      %v1972 = vadd.f32 %v1831, %v1971
      %v1973 = vpop.f32.mrb[0].mxu0
      %v1974 = vpop.f32.mrb[0].mxu0
      %v1975 = vadd.f32 %v1831, %v1974
      %v1976 = vpop.f32.mrb[0].mxu0
      %1977 = vdwg.mxu0
      %v1978 = vmax.f32 %v1916, 0.0
      %v1979 = vmax.f32 %v1919, 0.0
      %v1980 = vmax.f32 %v1924, 0.0
      %v1981 = vmax.f32 %v1927, 0.0
      %v1982 = vmax.f32 %v1932, 0.0
      %v1983 = vmax.f32 %v1935, 0.0
      %v1984 = vmax.f32 %v1940, 0.0
      %v1985 = vmax.f32 %v1943, 0.0
      %v1986 = vmax.f32 %v1948, 0.0
      %v1987 = vmax.f32 %v1951, 0.0
      %v1988 = vmax.f32 %v1956, 0.0
      %v1989 = vmax.f32 %v1959, 0.0
      %v1990 = vmax.f32 %v1964, 0.0
      %v1991 = vmax.f32 %v1967, 0.0
      %v1992 = vmax.f32 %v1972, 0.0
      %v1993 = vmax.f32 %v1975, 0.0
      %v1994 = vpack.c.bf16 %v1979, %v1978
      %v1995 = vpack.c.bf16 %v1981, %v1980
      %v1996 = vpack.c.bf16 %v1983, %v1982
      %v1997 = vpack.c.bf16 %v1985, %v1984
      %v1998 = vpack.c.bf16 %v1987, %v1986
      %v1999 = vpack.c.bf16 %v1989, %v1988
      %v2000 = vpack.c.bf16 %v1991, %v1990
      %v2001 = vpack.c.bf16 %v1993, %v1992
      %v2002 = vld [vmem:[%s15] sm:$0xf]
      %v2003 = vld [vmem:[%s15 + $0x4] sm:$0xf]
      %v2004 = vld [vmem:[%s15 + $0x8] sm:$0xf]
      %v2005 = vld [vmem:[%s15 + $0xc] sm:$0xf]
      %v2006 = vld [vmem:[%s15 + $0x10] sm:$0xf]
      %v2007 = vld [vmem:[%s15 + $0x14] sm:$0xf]
      %v2008 = vld [vmem:[%s15 + $0x18] sm:$0xf]
      %v2009 = vld [vmem:[%s15 + $0x1c] sm:$0xf]
      %v2010 = vld [vmem:[%s15 + $0x20] sm:$0xf]
      %v2011 = vld [vmem:[%s15 + $0x24] sm:$0xf]
      %v2012 = vld [vmem:[%s15 + $0x28] sm:$0xf]
      %v2013 = vld [vmem:[%s15 + $0x2c] sm:$0xf]
      %v2014 = vld [vmem:[%s15 + $0x30] sm:$0xf]
      %v2015 = vld [vmem:[%s15 + $0x34] sm:$0xf]
      %v2016 = vld [vmem:[%s15 + $0x38] sm:$0xf]
      %v2017 = vld [vmem:[%s15 + $0x3c] sm:$0xf]
      %v2018 = vld [vmem:[%s16] sm:$0x1]
      %v2020 = vlaneseq
      %v2021 = vshrl.u32 %v2020, 7
      %v2022 = vsub.s32 0, %v2021
      %v2023 = vrot.slane %v2018, %v2022
      %v2041 = vunpack.c.l.b16 %v2002
      %v2042 = vunpack.c.l.b16 %v2003
      %v2043 = vunpack.c.l.b16 %v2004
      %v2044 = vunpack.c.l.b16 %v2005
      %v2045 = vunpack.c.l.b16 %v2006
      %v2046 = vunpack.c.l.b16 %v2007
      %v2047 = vunpack.c.l.b16 %v2008
      %v2048 = vunpack.c.l.b16 %v2009
      %v2049 = vunpack.c.l.b16 %v2010
      %v2050 = vunpack.c.l.b16 %v2011
      %v2051 = vunpack.c.l.b16 %v2012
      %v2052 = vunpack.c.l.b16 %v2013
      %v2053 = vunpack.c.l.b16 %v2014
      %v2054 = vunpack.c.l.b16 %v2015
      %v2055 = vunpack.c.l.b16 %v2016
      %v2056 = vunpack.c.l.b16 %v2017
      %v2057 = vpack.c.b16 %v2042, %v2041
      %v2058 = vpack.c.b16 %v2044, %v2043
      %v2059 = vpack.c.b16 %v2046, %v2045
      %v2060 = vpack.c.b16 %v2048, %v2047
      %v2061 = vpack.c.b16 %v2050, %v2049
      %v2062 = vpack.c.b16 %v2052, %v2051
      %v2063 = vpack.c.b16 %v2054, %v2053
      %v2064 = vpack.c.b16 %v2056, %v2055
      %2073 = vmatprep.subr.bf16.mxu0 0
      %2074 = vmatpush1.bf16.msra.mxu0 %v2057
      %2075 = vmatprep.subr.bf16.mxu0 0
      %2076 = vmatpush1.bf16.msra.mxu0 %v2058
      %2077 = vmatprep.subr.bf16.mxu0 0
      %2078 = vmatpush1.bf16.msra.mxu0 %v2059
      %2079 = vmatprep.subr.bf16.mxu0 0
      %2080 = vmatpush1.bf16.msra.mxu0 %v2060
      %2081 = vmatprep.subr.bf16.mxu0 0
      %2082 = vmatpush1.bf16.msra.mxu0 %v2061
      %2083 = vmatprep.subr.bf16.mxu0 0
      %2084 = vmatpush1.bf16.msra.mxu0 %v2062
      %2085 = vmatprep.subr.bf16.mxu0 0
      %2086 = vmatpush1.bf16.msra.mxu0 %v2063
      %2087 = vmatprep.subr.bf16.mxu0 0
      %2088 = vmatpush1.bf16.msra.mxu0 %v2064
      %2089 = vmatprep.subr.bf16.mxu0 0
      %2090 = vmatpush1.bf16.msra.mxu0 0
      %2091 = vmatprep.subr.bf16.mxu0 0
      %2092 = vmatpush1.bf16.msra.mxu0 0
      %2093 = vmatprep.subr.bf16.mxu0 0
      %2094 = vmatpush1.bf16.msra.mxu0 0
      %2095 = vmatprep.subr.bf16.mxu0 0
      %2096 = vmatpush1.bf16.msra.mxu0 0
      %2097 = vmatprep.subr.bf16.mxu0 0
      %2098 = vmatpush1.bf16.msra.mxu0 0
      %2099 = vmatprep.subr.bf16.mxu0 0
      %2100 = vmatpush1.bf16.msra.mxu0 0
      %2101 = vmatprep.subr.bf16.mxu0 0
      %2102 = vmatpush1.bf16.msra.mxu0 0
      %2103 = vmatprep.subr.bf16.mxu0 0
      %2104 = vmatpush1.bf16.msra.mxu0 0
      %2105 = vmatprep.mubr.bf16.mxu0 0
      %2106 = vmatmul.mubr.bf16.gmra.mrb[0].mxu0 %v1994
      %v2107 = vpop.f32.mrb[0].mxu0
      %v2108 = vadd.f32 %v2023, %v2107
      %v2109 = vpop.f32.mrb[0].mxu0
      %v2110 = vpop.f32.mrb[0].mxu0
      %v2111 = vadd.f32 %v2023, %v2110
      %v2112 = vpop.f32.mrb[0].mxu0
      %2113 = vmatprep.mubr.bf16.mxu0 0
      %2114 = vmatmul.mubr.bf16.gmra.mrb[0].mxu0 %v1995
      %v2115 = vpop.f32.mrb[0].mxu0
      %v2116 = vadd.f32 %v2023, %v2115
      %v2117 = vpop.f32.mrb[0].mxu0
      %v2118 = vpop.f32.mrb[0].mxu0
      %v2119 = vadd.f32 %v2023, %v2118
      %v2120 = vpop.f32.mrb[0].mxu0
      %2121 = vmatprep.mubr.bf16.mxu0 0
      %2122 = vmatmul.mubr.bf16.gmra.mrb[0].mxu0 %v1996
      %v2123 = vpop.f32.mrb[0].mxu0
      %v2124 = vadd.f32 %v2023, %v2123
      %v2125 = vpop.f32.mrb[0].mxu0
      %v2126 = vpop.f32.mrb[0].mxu0
      %v2127 = vadd.f32 %v2023, %v2126
      %v2128 = vpop.f32.mrb[0].mxu0
      %2129 = vmatprep.mubr.bf16.mxu0 0
      %2130 = vmatmul.mubr.bf16.gmra.mrb[0].mxu0 %v1997
      %v2131 = vpop.f32.mrb[0].mxu0
      %v2132 = vadd.f32 %v2023, %v2131
      %v2133 = vpop.f32.mrb[0].mxu0
      %v2134 = vpop.f32.mrb[0].mxu0
      %v2135 = vadd.f32 %v2023, %v2134
      %v2136 = vpop.f32.mrb[0].mxu0
      %2137 = vmatprep.mubr.bf16.mxu0 0
      %2138 = vmatmul.mubr.bf16.gmra.mrb[0].mxu0 %v1998
      %v2139 = vpop.f32.mrb[0].mxu0
      %v2140 = vadd.f32 %v2023, %v2139
      %v2141 = vpop.f32.mrb[0].mxu0
      %v2142 = vpop.f32.mrb[0].mxu0
      %v2143 = vadd.f32 %v2023, %v2142
      %v2144 = vpop.f32.mrb[0].mxu0
      %2145 = vmatprep.mubr.bf16.mxu0 0
      %2146 = vmatmul.mubr.bf16.gmra.mrb[0].mxu0 %v1999
      %v2147 = vpop.f32.mrb[0].mxu0
      %v2148 = vadd.f32 %v2023, %v2147
      %v2149 = vpop.f32.mrb[0].mxu0
      %v2150 = vpop.f32.mrb[0].mxu0
      %v2151 = vadd.f32 %v2023, %v2150
      %v2152 = vpop.f32.mrb[0].mxu0
      %2153 = vmatprep.mubr.bf16.mxu0 0
      %2154 = vmatmul.mubr.bf16.gmra.mrb[0].mxu0 %v2000
      %v2155 = vpop.f32.mrb[0].mxu0
      %v2156 = vadd.f32 %v2023, %v2155
      %v2157 = vpop.f32.mrb[0].mxu0
      %v2158 = vpop.f32.mrb[0].mxu0
      %v2159 = vadd.f32 %v2023, %v2158
      %v2160 = vpop.f32.mrb[0].mxu0
      %2161 = vmatprep.mubr.bf16.mxu0 0
      %2162 = vmatmul.mubr.bf16.gmra.mrb[0].mxu0 %v2001
      %v2163 = vpop.f32.mrb[0].mxu0
      %v2164 = vadd.f32 %v2023, %v2163
      %v2165 = vpop.f32.mrb[0].mxu0
      %v2166 = vpop.f32.mrb[0].mxu0
      %v2167 = vadd.f32 %v2023, %v2166
      %v2168 = vpop.f32.mrb[0].mxu0
      %2169 = vdwg.mxu0
      %v2170 = vxor.u32 %v2108, 2147483648
      %v2171 = vxor.u32 %v2111, 2147483648
      %v2172 = vxor.u32 %v2116, 2147483648
      %v2173 = vxor.u32 %v2119, 2147483648
      %v2174 = vxor.u32 %v2124, 2147483648
      %v2175 = vxor.u32 %v2127, 2147483648
      %v2176 = vxor.u32 %v2132, 2147483648
      %v2177 = vxor.u32 %v2135, 2147483648
      %v2178 = vxor.u32 %v2140, 2147483648
      %v2179 = vxor.u32 %v2143, 2147483648
      %v2180 = vxor.u32 %v2148, 2147483648
      %v2181 = vxor.u32 %v2151, 2147483648
      %v2182 = vxor.u32 %v2156, 2147483648
      %v2183 = vxor.u32 %v2159, 2147483648
      %v2184 = vxor.u32 %v2164, 2147483648
      %v2185 = vxor.u32 %v2167, 2147483648
      %v2186 = vmul.f32 %v2170, 1.442695
      %v2187 = vpow.pop %v2186
      %v2188 = vmul.f32 %v2171, 1.442695
      %v2189 = vpow.pop %v2188
      %v2190 = vmul.f32 %v2172, 1.442695
      %v2191 = vpow.pop %v2190
      %v2192 = vmul.f32 %v2173, 1.442695
      %v2193 = vpow.pop %v2192
      %v2194 = vmul.f32 %v2174, 1.442695
      %v2195 = vpow.pop %v2194
      %v2196 = vmul.f32 %v2175, 1.442695
      %v2197 = vpow.pop %v2196
      %v2198 = vmul.f32 %v2176, 1.442695
      %v2199 = vpow.pop %v2198
      %v2200 = vmul.f32 %v2177, 1.442695
      %v2201 = vpow.pop %v2200
      %v2202 = vmul.f32 %v2178, 1.442695
      %v2203 = vpow.pop %v2202
      %v2204 = vmul.f32 %v2179, 1.442695
      %v2205 = vpow.pop %v2204
      %v2206 = vmul.f32 %v2180, 1.442695
      %v2207 = vpow.pop %v2206
      %v2208 = vmul.f32 %v2181, 1.442695
      %v2209 = vpow.pop %v2208
      %v2210 = vmul.f32 %v2182, 1.442695
      %v2211 = vpow.pop %v2210
      %v2212 = vmul.f32 %v2183, 1.442695
      %v2213 = vpow.pop %v2212
      %v2214 = vmul.f32 %v2184, 1.442695
      %v2215 = vpow.pop %v2214
      %v2216 = vmul.f32 %v2185, 1.442695
      %v2217 = vpow.pop %v2216
      %v2218 = vadd.f32 %v2187, 1.0
      %v2219 = vadd.f32 %v2189, 1.0
      %v2220 = vadd.f32 %v2191, 1.0
      %v2221 = vadd.f32 %v2193, 1.0
      %v2222 = vadd.f32 %v2195, 1.0
      %v2223 = vadd.f32 %v2197, 1.0
      %v2224 = vadd.f32 %v2199, 1.0
      %v2225 = vadd.f32 %v2201, 1.0
      %v2226 = vadd.f32 %v2203, 1.0
      %v2227 = vadd.f32 %v2205, 1.0
      %v2228 = vadd.f32 %v2207, 1.0
      %v2229 = vadd.f32 %v2209, 1.0
      %v2230 = vadd.f32 %v2211, 1.0
      %v2231 = vadd.f32 %v2213, 1.0
      %v2232 = vadd.f32 %v2215, 1.0
      %v2233 = vadd.f32 %v2217, 1.0
      %v2234 = vrcp.pop %v2218
      %v2235 = vmul.f32 1.0, %v2234
      %v2236 = vrcp.pop %v2219
      %v2237 = vmul.f32 1.0, %v2236
      %v2238 = vrcp.pop %v2220
      %v2239 = vmul.f32 1.0, %v2238
      %v2240 = vrcp.pop %v2221
      %v2241 = vmul.f32 1.0, %v2240
      %v2242 = vrcp.pop %v2222
      %v2243 = vmul.f32 1.0, %v2242
      %v2244 = vrcp.pop %v2223
      %v2245 = vmul.f32 1.0, %v2244
      %v2246 = vrcp.pop %v2224
      %v2247 = vmul.f32 1.0, %v2246
      %v2248 = vrcp.pop %v2225
      %v2249 = vmul.f32 1.0, %v2248
      %v2250 = vrcp.pop %v2226
      %v2251 = vmul.f32 1.0, %v2250
      %v2252 = vrcp.pop %v2227
      %v2253 = vmul.f32 1.0, %v2252
      %v2254 = vrcp.pop %v2228
      %v2255 = vmul.f32 1.0, %v2254
      %v2256 = vrcp.pop %v2229
      %v2257 = vmul.f32 1.0, %v2256
      %v2258 = vrcp.pop %v2230
      %v2259 = vmul.f32 1.0, %v2258
      %v2260 = vrcp.pop %v2231
      %v2261 = vmul.f32 1.0, %v2260
      %v2262 = vrcp.pop %v2232
      %v2263 = vmul.f32 1.0, %v2262
      %v2264 = vrcp.pop %v2233
      %v2265 = vmul.f32 1.0, %v2264
      %2266 = vst [vmem:[%s591] sm:$0xff] %v2235
      %2267 = vst [vmem:[%s591 + $0x8] sm:$0xff] %v2237
      %2268 = vst [vmem:[%s591 + $0x10] sm:$0xff] %v2239
      %2269 = vst [vmem:[%s591 + $0x18] sm:$0xff] %v2241
      %2270 = vst [vmem:[%s591 + $0x20] sm:$0xff] %v2243
      %2271 = vst [vmem:[%s591 + $0x28] sm:$0xff] %v2245
      %2272 = vst [vmem:[%s591 + $0x30] sm:$0xff] %v2247
      %2273 = vst [vmem:[%s591 + $0x38] sm:$0xff] %v2249
      %2274 = vst [vmem:[%s591 + $0x40] sm:$0xff] %v2251
      %2275 = vst [vmem:[%s591 + $0x48] sm:$0xff] %v2253
      %2276 = vst [vmem:[%s591 + $0x50] sm:$0xff] %v2255
      %2277 = vst [vmem:[%s591 + $0x58] sm:$0xff] %v2257
      %2278 = vst [vmem:[%s591 + $0x60] sm:$0xff] %v2259
      %2279 = vst [vmem:[%s591 + $0x68] sm:$0xff] %v2261
      %2280 = vst [vmem:[%s591 + $0x70] sm:$0xff] %v2263
      %2281 = vst [vmem:[%s591 + $0x78] sm:$0xff] %v2265
      %s2282 = smul.u32 16, %s30
      %p2283 = scmp.lt.s32.totalorder %s2282, 31
      %s2284 = scalar_select %p2283, %s2282, 31
      %s2285 = smul.addr %s2284, 8
      %s2286 = scalar_lea.vmem %s17, %s2285
      %s2287 = smul.u32 16, %s30
      %p2288 = scmp.lt.s32.totalorder %s2287, 31
      %s2289 = scalar_select %p2288, %s2287, 31
      %s2290 = smul.addr %s2289, 8
      %s2291 = scalar_lea.vmem %s18, %s2290
      // Predicated region
      $region89: #{_autoencoder_forward_impl.1} parent=87 // pred_check
        %p2292 = pneg %p410
      $region90: #{_autoencoder_forward_impl.1} parent=87 // pred_check_branch
        %2294 = sbr.rel (%p2292) target = $region92
      $region91: #{_autoencoder_forward_impl.1} parent=87 // pred_region
        %s2295 = smul.u32 16, %s30
      $region92: #{_autoencoder_forward_impl.1} parent=87 // pred_fallthru
        _
      // Predicated region
      $region93: #{_autoencoder_forward_impl.1} parent=87 // pred_check
        %p2296 = pneg %p436
      $region94: #{_autoencoder_forward_impl.1} parent=87 // pred_check_branch
        %2298 = sbr.rel (%p2296) target = $region96
      $region95: #{_autoencoder_forward_impl.1} parent=87 // pred_region
        %s2299 = smul.u32 16, %s30
      $region96: #{_autoencoder_forward_impl.1} parent=87 // pred_fallthru
        _
    $region88: #{_autoencoder_forward_impl.1} parent=5 // pred_fallthru
      _
    %p2300 = scmp.le.s32.totalorder 2, %s25
    // Predicated region
    $region97: #{_autoencoder_forward_impl.1} parent=5 // pred_check
      %p2301 = pneg %p2300
    $region98: #{_autoencoder_forward_impl.1} parent=5 // pred_check_branch
      %2303 = sbr.rel (%p2301) target = $region100
    $region99: #{_autoencoder_forward_impl.1} parent=5 // pred_region
      %s2304 = ssub.s32 %s25, 2
      // Predicated region
      $region101: #{_autoencoder_forward_impl.1} parent=99 // pred_check
        %p2305 = pneg %p416
      $region102: #{_autoencoder_forward_impl.1} parent=99 // pred_check_branch
        %2307 = sbr.rel (%p2305) target = $region104
      $region103: #{_autoencoder_forward_impl.1} parent=99 // pred_region
        %s2308 = smul.u32 16, %s31
        %p2309 = scmp.lt.s32.totalorder %s2308, 31
        %s2310 = scalar_select %p2309, %s2308, 31
        %s2311 = smul.addr %s2310, 8
        %s2312 = scalar_lea.vmem %s17, %s2311
      $region104: #{_autoencoder_forward_impl.1} parent=99 // pred_fallthru
        _
      // Predicated region
      $region105: #{_autoencoder_forward_impl.1} parent=99 // pred_check
        %p2313 = pneg %p442
      $region106: #{_autoencoder_forward_impl.1} parent=99 // pred_check_branch
        %2315 = sbr.rel (%p2313) target = $region108
      $region107: #{_autoencoder_forward_impl.1} parent=99 // pred_region
        %s2316 = smul.u32 16, %s31
        %p2317 = scmp.lt.s32.totalorder %s2316, 31
        %s2318 = scalar_select %p2317, %s2316, 31
        %s2319 = smul.addr %s2318, 8
        %s2320 = scalar_lea.vmem %s18, %s2319
      $region108: #{_autoencoder_forward_impl.1} parent=99 // pred_fallthru
        _
    $region100: #{_autoencoder_forward_impl.1} parent=5 // pred_fallthru
      _
  $region6: #{_autoencoder_forward_impl.1} parent=0 // loop_footer
    %s29 = sadd.s32 1, %s25
  $region7: #{_autoencoder_forward_impl.1} parent=0 // loop_footer_branch
    %24 = sbr.rel target = $region3
  $region8: #{_autoencoder_forward_impl.1} parent=0 // loop_exit
    _

</llo_original>
